<compile_context>
chip_gen: v5e
topology: v5e:2x2
jax: 0.10.0
libtpu: 0.0.40
codegen_flags: <defaults>
</compile_context>

<pallas_src>
import functools

import jax
import jax.numpy as jnp
from jax.experimental import pallas as pl
from jax.experimental.pallas import tpu as pltpu


def actor_critic_kernel(state_ref, action_ref,
                        w1_ref, b1_ref,
                        wa2_ref, ba2_ref, wv2_ref, bv2_ref,
                        wa3_ref, ba3_ref, wv3_ref, bv3_ref,
                        out_ref, *, n_latent_var):
    """One batch tile of ActorCritic.evaluate()."""
    H = n_latent_var
    wdt = w1_ref.dtype                                    # bf16 weights
    x = state_ref[...].astype(wdt)                        # (TB, S)

    # Layer 1: both heads fused column-wise -> one matmul, f32 accumulation.
    h1 = jnp.tanh(jnp.dot(x, w1_ref[...],
                          preferred_element_type=jnp.float32) + b1_ref[...])
    h1 = h1.astype(wdt)                                   # (TB, 2H)
    ha, hv = h1[:, :H], h1[:, H:]                         # split per head

    # Layers 2/3: per-head matmuls (no block-diagonal zero padding).
    h2a = jnp.tanh(jnp.dot(ha, wa2_ref[...],
                           preferred_element_type=jnp.float32) + ba2_ref[...])
    h2v = jnp.tanh(jnp.dot(hv, wv2_ref[...],
                           preferred_element_type=jnp.float32) + bv2_ref[...])
    logits = jnp.dot(h2a.astype(wdt), wa3_ref[...],
                     preferred_element_type=jnp.float32) + ba3_ref[...]  # (TB, A)
    value = jnp.dot(h2v.astype(wdt), wv3_ref[...],
                    preferred_element_type=jnp.float32) + bv3_ref[...]   # (TB, 1)

    # Numerically stable log-softmax in f32; exact probabilities for entropy.
    m = jnp.max(logits, axis=-1, keepdims=True)
    z = logits - m
    denom = jnp.sum(jnp.exp(z), axis=-1, keepdims=True)
    logp = z - jnp.log(denom)                             # (TB, A)
    p = jnp.exp(logp)                                     # exact probs

    # Categorical.log_prob(action): one-hot reduction (no dynamic gather on TPU).
    a = action_ref[...]                                   # (TB, 1) int32
    col = jax.lax.broadcasted_iota(jnp.int32, logp.shape, 1)
    onehot = (col == a).astype(jnp.float32)
    logprob = jnp.sum(onehot * logp, axis=-1, keepdims=True)   # (TB, 1)
    entropy = -jnp.sum(p * logp, axis=-1, keepdims=True)       # (TB, 1)

    # Pack into an (8, TB) lane-dense block (batch on the lane axis):
    # build (TB, 8) with columns 0/1/2 = logprob/value/entropy, then one XLU
    # transpose + one unmasked full-tile store.
    tb = out_ref.shape[1]
    lane = jax.lax.broadcasted_iota(jnp.int32, (tb, 8), 1)
    packed = (jnp.where(lane == 0, logprob, 0.0)
              + jnp.where(lane == 1, value, 0.0)
              + jnp.where(lane == 2, entropy, 0.0))            # (TB, 8)
    out_ref[...] = packed.T                                    # (8, TB)


def pack_params(p, weights_dtype=jnp.bfloat16):
    """Layer 1 fused column-wise across heads; layers 2/3 kept per head.

    Weights cast to bf16 for the MXU (halves weight VMEM/DMA, ~2x MXU rate on
    all of v5e/v6e/v7x); biases stay f32 (added after the f32 accumulation)."""
    return dict(
        w1=jnp.concatenate([p["wa1"], p["wv1"]], axis=1).astype(weights_dtype),
        b1=jnp.concatenate([p["ba1"], p["bv1"]], axis=1).astype(jnp.float32),
        wa2=p["wa2"].astype(weights_dtype), ba2=p["ba2"].astype(jnp.float32),
        wv2=p["wv2"].astype(weights_dtype), bv2=p["bv2"].astype(jnp.float32),
        wa3=p["wa3"].astype(weights_dtype), ba3=p["ba3"].astype(jnp.float32),
        wv3=p["wv3"].astype(weights_dtype), bv3=p["bv3"].astype(jnp.float32),
        n_actions=p["wa3"].shape[1], n_latent_var=p["wa1"].shape[1],
    )


def _choose_block_rows(B, block_rows):
    """Batch tile: multiple of 128 (lane axis of the transposed output block),
    capped at B//2 so the 'parallel' grid has >=2 steps (keeps both v7x TCs
    busy); on single-TC v5e/v6e the bigger-tile rule still dominates."""
    if B < 128:
        return B                       # single full block (full-dim BlockSpec)
    tb = max(128, (min(block_rows, B) // 128) * 128)
    half = ((B // 2) // 128) * 128
    if half >= 128:
        tb = min(tb, half)
    return tb


def actor_critic_evaluate(state, action, packed, *, block_rows=1024):
    """Pallas implementation of ActorCritic.evaluate(state, action).

    Returns (action_logprobs [B], state_value [B], dist_entropy [B]).
    Assumes action ids are valid in [0, n_actions)."""
    B, S = state.shape
    H = packed["n_latent_var"]

    TB = _choose_block_rows(B, block_rows)
    grid = (pl.cdiv(B, TB),)           # no jnp.pad: Pallas clips the ragged tail

    action2d = action.astype(jnp.int32).reshape(B, 1)

    row = lambda i: (i, 0)             # batch-tiled, pipelined inputs
    const = lambda i: (0, 0)           # weights/biases: VMEM-resident across grid
    # NOTE: constant-index weight blocks could be single-buffered
    # (pipeline_mode) to save VMEM at large H; negligible at these sizes.

    out = pl.pallas_call(
        functools.partial(actor_critic_kernel, n_latent_var=H),
        out_shape=jax.ShapeDtypeStruct((8, B), jnp.float32),
        grid=grid,
        in_specs=[
            pl.BlockSpec((TB, S), row),                    # state tile
            pl.BlockSpec((TB, 1), row),                    # action tile
            pl.BlockSpec(packed["w1"].shape, const),
            pl.BlockSpec(packed["b1"].shape, const),
            pl.BlockSpec(packed["wa2"].shape, const),
            pl.BlockSpec(packed["ba2"].shape, const),
            pl.BlockSpec(packed["wv2"].shape, const),
            pl.BlockSpec(packed["bv2"].shape, const),
            pl.BlockSpec(packed["wa3"].shape, const),
            pl.BlockSpec(packed["ba3"].shape, const),
            pl.BlockSpec(packed["wv3"].shape, const),
            pl.BlockSpec(packed["bv3"].shape, const),
        ],
        out_specs=pl.BlockSpec((8, TB), lambda i: (0, i)),  # batch on lane axis
        compiler_params=pltpu.CompilerParams(
            dimension_semantics=("parallel",)),
    )(state, action2d,
      packed["w1"], packed["b1"],
      packed["wa2"], packed["ba2"], packed["wv2"], packed["bv2"],
      packed["wa3"], packed["ba3"], packed["wv3"], packed["bv3"])

    # Sublane rows 0/1/2 = logprob / value / entropy (contiguous row reads).
    return out[0], out[1], out[2]


def make_params(key, state_dim, action_dim, n_latent_var):
    """Deterministic synthetic parameters (weights stored as [in, out])."""
    ks = jax.random.split(key, 12)

    def lin(kw, kb, fan_in, fan_out):
        bound = 1.0 / jnp.sqrt(jnp.float32(fan_in))
        w = jax.random.uniform(kw, (fan_in, fan_out), jnp.float32, -bound, bound)
        b = jax.random.uniform(kb, (1, fan_out), jnp.float32, -bound, bound)
        return w, b

    wa1, ba1 = lin(ks[0], ks[1], state_dim, n_latent_var)
    wa2, ba2 = lin(ks[2], ks[3], n_latent_var, n_latent_var)
    wa3, ba3 = lin(ks[4], ks[5], n_latent_var, action_dim)
    wv1, bv1 = lin(ks[6], ks[7], state_dim, n_latent_var)
    wv2, bv2 = lin(ks[8], ks[9], n_latent_var, n_latent_var)
    wv3, bv3 = lin(ks[10], ks[11], n_latent_var, 1)
    return dict(wa1=wa1, ba1=ba1, wa2=wa2, ba2=ba2, wa3=wa3, ba3=ba3,
                wv1=wv1, bv1=bv1, wv2=wv2, bv2=bv2, wv3=wv3, bv3=bv3)


def reference_evaluate(state, action, p):
    """Pure-JAX f32 reference mirroring the PyTorch module (for verification)."""
    h = jnp.tanh(state @ p["wa1"] + p["ba1"])
    h = jnp.tanh(h @ p["wa2"] + p["ba2"])
    logits = h @ p["wa3"] + p["ba3"]
    logp = jax.nn.log_softmax(logits, axis=-1)
    probs = jnp.exp(logp)
    lp_a = jnp.take_along_axis(logp, action.reshape(-1, 1), axis=-1)[:, 0]
    ent = -jnp.sum(probs * logp, axis=-1)
    hv = jnp.tanh(state @ p["wv1"] + p["bv1"])
    hv = jnp.tanh(hv @ p["wv2"] + p["bv2"])
    v = (hv @ p["wv3"] + p["bv3"])[:, 0]
    return lp_a, v, ent


if __name__ == "__main__":
    state_dim, action_dim, n_latent_var = 8, 4, 32
    batch = 256          # TB = 128 -> grid = (2,): both v7x TCs get one tile

    key = jax.random.PRNGKey(0)
    k_state, k_action, k_params = jax.random.split(key, 3)

    state = jax.random.normal(k_state, (batch, state_dim), jnp.float32)
    action = jax.random.randint(k_action, (batch,), 0, action_dim, jnp.int32)
    params = make_params(k_params, state_dim, action_dim, n_latent_var)
    packed = pack_params(params)

    logprob, value, entropy = actor_critic_evaluate(state, action, packed)
    jax.block_until_ready((logprob, value, entropy))

    ref_lp, ref_v, ref_ent = reference_evaluate(state, action, params)
    # bf16-weight matmuls (f32 accumulation) vs. the pure-f32 reference:
    # expected |error| ~1e-3; 2e-2 tolerance still catches any structural bug.
    assert jnp.allclose(logprob, ref_lp, atol=2e-2, rtol=2e-2)
    assert jnp.allclose(value, ref_v, atol=2e-2, rtol=2e-2)
    assert jnp.allclose(entropy, ref_ent, atol=2e-2, rtol=2e-2)

    print("KERNEL_OK")
</pallas_src>

<mosaic_0001>
module attributes {stable_mosaic.version = 11 : i64} {
  func.func @actor_critic_kernel(%arg0: i32, %arg1: memref<128x8xf32, #tpu.memory_space<vmem>>, %arg2: memref<128x1xi32, #tpu.memory_space<vmem>>, %arg3: memref<8x64xbf16, #tpu.memory_space<vmem>>, %arg4: memref<1x64xf32, #tpu.memory_space<vmem>>, %arg5: memref<32x32xbf16, #tpu.memory_space<vmem>>, %arg6: memref<1x32xf32, #tpu.memory_space<vmem>>, %arg7: memref<32x32xbf16, #tpu.memory_space<vmem>>, %arg8: memref<1x32xf32, #tpu.memory_space<vmem>>, %arg9: memref<32x4xbf16, #tpu.memory_space<vmem>>, %arg10: memref<1x4xf32, #tpu.memory_space<vmem>>, %arg11: memref<32x1xbf16, #tpu.memory_space<vmem>>, %arg12: memref<1x1xf32, #tpu.memory_space<vmem>>, %arg13: memref<8x128xf32, #tpu.memory_space<vmem>>) attributes {dimension_semantics = [#tpu.dimension_semantics<parallel>], iteration_bounds = array<i64: 2>, scalar_prefetch = 0 : i64, scratch_operands = 0 : i64, tpu.core_type = #tpu.core_type<tc>, window_params = [{transform_indices = @transform_0, window_bounds = array<i64: 128, 8>}, {transform_indices = @transform_1, window_bounds = array<i64: 128, 1>}, {pipeline_mode = #tpu.pipeline_mode<synchronous>, transform_indices = @transform_2, window_bounds = array<i64: 8, 64>}, {pipeline_mode = #tpu.pipeline_mode<synchronous>, transform_indices = @transform_3, window_bounds = array<i64: 1, 64>}, {pipeline_mode = #tpu.pipeline_mode<synchronous>, transform_indices = @transform_4, window_bounds = array<i64: 32, 32>}, {pipeline_mode = #tpu.pipeline_mode<synchronous>, transform_indices = @transform_5, window_bounds = array<i64: 1, 32>}, {pipeline_mode = #tpu.pipeline_mode<synchronous>, transform_indices = @transform_6, window_bounds = array<i64: 32, 32>}, {pipeline_mode = #tpu.pipeline_mode<synchronous>, transform_indices = @transform_7, window_bounds = array<i64: 1, 32>}, {pipeline_mode = #tpu.pipeline_mode<synchronous>, transform_indices = @transform_8, window_bounds = array<i64: 32, 4>}, {pipeline_mode = #tpu.pipeline_mode<synchronous>, transform_indices = @transform_9, window_bounds = array<i64: 1, 4>}, {pipeline_mode = #tpu.pipeline_mode<synchronous>, transform_indices = @transform_10, window_bounds = array<i64: 32, 1>}, {pipeline_mode = #tpu.pipeline_mode<synchronous>, transform_indices = @transform_11, window_bounds = array<i64: 1, 1>}, {transform_indices = @transform_12, window_bounds = array<i64: 8, 128>}]} {
    %c0 = arith.constant 0 : index
    %c0_0 = arith.constant 0 : index
    %0 = vector.load %arg1[%c0, %c0_0] : memref<128x8xf32, #tpu.memory_space<vmem>>, vector<128x8xf32>
    %1 = arith.truncf %0 : vector<128x8xf32> to vector<128x8xbf16>
    %c0_1 = arith.constant 0 : index
    %c0_2 = arith.constant 0 : index
    %2 = vector.load %arg3[%c0_1, %c0_2] : memref<8x64xbf16, #tpu.memory_space<vmem>>, vector<8x64xbf16>
    %cst = arith.constant dense<0.000000e+00> : vector<128x64xf32>
    %3 = tpu.matmul %1, %2, %cst {dimension_numbers = #tpu.dot_dimension_numbers<[1], [0], [0], [1], [0, 0, 1, 1], [], []>} : vector<128x8xbf16>, vector<8x64xbf16>, vector<128x64xf32> -> vector<128x64xf32>
    %c0_3 = arith.constant 0 : index
    %c0_4 = arith.constant 0 : index
    %4 = vector.load %arg4[%c0_3, %c0_4] : memref<1x64xf32, #tpu.memory_space<vmem>>, vector<1x64xf32>
    %5 = vector.broadcast %4 : vector<1x64xf32> to vector<128x64xf32>
    %6 = arith.addf %3, %5 : vector<128x64xf32>
    %7 = math.tanh %6 : vector<128x64xf32>
    %8 = arith.truncf %7 : vector<128x64xf32> to vector<128x64xbf16>
    %9 = vector.extract_strided_slice %8 {offsets = [0, 0], sizes = [128, 32], strides = [1, 1]} : vector<128x64xbf16> to vector<128x32xbf16>
    %10 = vector.extract_strided_slice %8 {offsets = [0, 32], sizes = [128, 32], strides = [1, 1]} : vector<128x64xbf16> to vector<128x32xbf16>
    %c0_5 = arith.constant 0 : index
    %c0_6 = arith.constant 0 : index
    %11 = vector.load %arg5[%c0_5, %c0_6] : memref<32x32xbf16, #tpu.memory_space<vmem>>, vector<32x32xbf16>
    %cst_7 = arith.constant dense<0.000000e+00> : vector<128x32xf32>
    %12 = tpu.matmul %9, %11, %cst_7 {dimension_numbers = #tpu.dot_dimension_numbers<[1], [0], [0], [1], [0, 0, 1, 1], [], []>} : vector<128x32xbf16>, vector<32x32xbf16>, vector<128x32xf32> -> vector<128x32xf32>
    %c0_8 = arith.constant 0 : index
    %c0_9 = arith.constant 0 : index
    %13 = vector.load %arg6[%c0_8, %c0_9] : memref<1x32xf32, #tpu.memory_space<vmem>>, vector<1x32xf32>
    %14 = vector.broadcast %13 : vector<1x32xf32> to vector<128x32xf32>
    %15 = arith.addf %12, %14 : vector<128x32xf32>
    %16 = math.tanh %15 : vector<128x32xf32>
    %c0_10 = arith.constant 0 : index
    %c0_11 = arith.constant 0 : index
    %17 = vector.load %arg7[%c0_10, %c0_11] : memref<32x32xbf16, #tpu.memory_space<vmem>>, vector<32x32xbf16>
    %cst_12 = arith.constant dense<0.000000e+00> : vector<128x32xf32>
    %18 = tpu.matmul %10, %17, %cst_12 {dimension_numbers = #tpu.dot_dimension_numbers<[1], [0], [0], [1], [0, 0, 1, 1], [], []>} : vector<128x32xbf16>, vector<32x32xbf16>, vector<128x32xf32> -> vector<128x32xf32>
    %c0_13 = arith.constant 0 : index
    %c0_14 = arith.constant 0 : index
    %19 = vector.load %arg8[%c0_13, %c0_14] : memref<1x32xf32, #tpu.memory_space<vmem>>, vector<1x32xf32>
    %20 = vector.broadcast %19 : vector<1x32xf32> to vector<128x32xf32>
    %21 = arith.addf %18, %20 : vector<128x32xf32>
    %22 = math.tanh %21 : vector<128x32xf32>
    %23 = arith.truncf %16 : vector<128x32xf32> to vector<128x32xbf16>
    %c0_15 = arith.constant 0 : index
    %c0_16 = arith.constant 0 : index
    %24 = vector.load %arg9[%c0_15, %c0_16] : memref<32x4xbf16, #tpu.memory_space<vmem>>, vector<32x4xbf16>
    %cst_17 = arith.constant dense<0.000000e+00> : vector<128x4xf32>
    %25 = tpu.matmul %23, %24, %cst_17 {dimension_numbers = #tpu.dot_dimension_numbers<[1], [0], [0], [1], [0, 0, 1, 1], [], []>} : vector<128x32xbf16>, vector<32x4xbf16>, vector<128x4xf32> -> vector<128x4xf32>
    %c0_18 = arith.constant 0 : index
    %c0_19 = arith.constant 0 : index
    %26 = vector.load %arg10[%c0_18, %c0_19] : memref<1x4xf32, #tpu.memory_space<vmem>>, vector<1x4xf32>
    %27 = vector.broadcast %26 : vector<1x4xf32> to vector<128x4xf32>
    %28 = arith.addf %25, %27 : vector<128x4xf32>
    %29 = arith.truncf %22 : vector<128x32xf32> to vector<128x32xbf16>
    %c0_20 = arith.constant 0 : index
    %c0_21 = arith.constant 0 : index
    %30 = vector.load %arg11[%c0_20, %c0_21] : memref<32x1xbf16, #tpu.memory_space<vmem>>, vector<32x1xbf16>
    %cst_22 = arith.constant dense<0.000000e+00> : vector<128x1xf32>
    %31 = tpu.matmul %29, %30, %cst_22 {dimension_numbers = #tpu.dot_dimension_numbers<[1], [0], [0], [1], [0, 0, 1, 1], [], []>} : vector<128x32xbf16>, vector<32x1xbf16>, vector<128x1xf32> -> vector<128x1xf32>
    %c0_23 = arith.constant 0 : index
    %c0_24 = arith.constant 0 : index
    %32 = vector.load %arg12[%c0_23, %c0_24] : memref<1x1xf32, #tpu.memory_space<vmem>>, vector<1x1xf32>
    %33 = vector.broadcast %32 : vector<1x1xf32> to vector<128x1xf32>
    %34 = arith.addf %31, %33 : vector<128x1xf32>
    %cst_25 = arith.constant dense<0xFF800000> : vector<128xf32>
    %35 = vector.multi_reduction <maximumf>, %28, %cst_25 [1] : vector<128x4xf32> to vector<128xf32>
    %36 = vector.shape_cast %35 : vector<128xf32> to vector<128x1xf32>
    %37 = vector.broadcast %36 : vector<128x1xf32> to vector<128x4xf32>
    %38 = arith.subf %28, %37 : vector<128x4xf32>
    %39 = math.exp %38 : vector<128x4xf32>
    %cst_26 = arith.constant dense<0.000000e+00> : vector<128xf32>
    %40 = vector.multi_reduction <add>, %39, %cst_26 [1] : vector<128x4xf32> to vector<128xf32>
    %41 = vector.shape_cast %40 : vector<128xf32> to vector<128x1xf32>
    %42 = math.log %41 : vector<128x1xf32>
    %43 = vector.broadcast %42 : vector<128x1xf32> to vector<128x4xf32>
    %44 = arith.subf %38, %43 : vector<128x4xf32>
    %45 = math.exp %44 : vector<128x4xf32>
    %c0_27 = arith.constant 0 : index
    %c0_28 = arith.constant 0 : index
    %46 = vector.load %arg2[%c0_27, %c0_28] : memref<128x1xi32, #tpu.memory_space<vmem>>, vector<128x1xi32>
    %47 = tpu.iota {dimensions = array<i32: 1>} : vector<128x4xi32>
    %48 = vector.broadcast %46 : vector<128x1xi32> to vector<128x4xi32>
    %49 = arith.cmpi eq, %47, %48 : vector<128x4xi32>
    %50 = arith.extui %49 : vector<128x4xi1> to vector<128x4xi32>
    %51 = arith.sitofp %50 : vector<128x4xi32> to vector<128x4xf32>
    %52 = arith.mulf %51, %44 : vector<128x4xf32>
    %cst_29 = arith.constant dense<0.000000e+00> : vector<128xf32>
    %53 = vector.multi_reduction <add>, %52, %cst_29 [1] : vector<128x4xf32> to vector<128xf32>
    %54 = vector.shape_cast %53 : vector<128xf32> to vector<128x1xf32>
    %55 = arith.mulf %45, %44 : vector<128x4xf32>
    %cst_30 = arith.constant dense<0.000000e+00> : vector<128xf32>
    %56 = vector.multi_reduction <add>, %55, %cst_30 [1] : vector<128x4xf32> to vector<128xf32>
    %57 = vector.shape_cast %56 : vector<128xf32> to vector<128x1xf32>
    %cst_31 = arith.constant 0.000000e+00 : f32
    %58 = vector.broadcast %cst_31 : f32 to vector<128x1xf32>
    %59 = arith.subf %58, %57 : vector<128x1xf32>
    %60 = tpu.iota {dimensions = array<i32: 1>} : vector<128x8xi32>
    %c0_i32 = arith.constant 0 : i32
    %61 = vector.broadcast %c0_i32 : i32 to vector<128x8xi32>
    %62 = arith.cmpi eq, %60, %61 : vector<128x8xi32>
    %cst_32 = arith.constant 0.000000e+00 : f32
    %63 = vector.shape_cast %54 : vector<128x1xf32> to vector<128x1xf32>
    %64 = vector.broadcast %63 : vector<128x1xf32> to vector<128x8xf32>
    %65 = vector.broadcast %cst_32 : f32 to vector<128x8xf32>
    %66 = arith.select %62, %64, %65 : vector<128x8xi1>, vector<128x8xf32>
    %c1_i32 = arith.constant 1 : i32
    %67 = vector.broadcast %c1_i32 : i32 to vector<128x8xi32>
    %68 = arith.cmpi eq, %60, %67 : vector<128x8xi32>
    %cst_33 = arith.constant 0.000000e+00 : f32
    %69 = vector.shape_cast %34 : vector<128x1xf32> to vector<128x1xf32>
    %70 = vector.broadcast %69 : vector<128x1xf32> to vector<128x8xf32>
    %71 = vector.broadcast %cst_33 : f32 to vector<128x8xf32>
    %72 = arith.select %68, %70, %71 : vector<128x8xi1>, vector<128x8xf32>
    %73 = arith.addf %66, %72 : vector<128x8xf32>
    %c2_i32 = arith.constant 2 : i32
    %74 = vector.broadcast %c2_i32 : i32 to vector<128x8xi32>
    %75 = arith.cmpi eq, %60, %74 : vector<128x8xi32>
    %cst_34 = arith.constant 0.000000e+00 : f32
    %76 = vector.shape_cast %59 : vector<128x1xf32> to vector<128x1xf32>
    %77 = vector.broadcast %76 : vector<128x1xf32> to vector<128x8xf32>
    %78 = vector.broadcast %cst_34 : f32 to vector<128x8xf32>
    %79 = arith.select %75, %77, %78 : vector<128x8xi1>, vector<128x8xf32>
    %80 = arith.addf %73, %79 : vector<128x8xf32>
    %81 = tpu.transpose %80, [1, 0] : vector<128x8xf32> -> vector<8x128xf32>
    %c0_35 = arith.constant 0 : index
    %c0_36 = arith.constant 0 : index
    %82 = vector.load %arg13[%c0_35, %c0_36] : memref<8x128xf32, #tpu.memory_space<vmem>>, vector<8x128xf32>
    tpu.vector_store %arg13[%c0_35, %c0_36], %81 {strides = array<i32>} : memref<8x128xf32, #tpu.memory_space<vmem>>, vector<8x128xf32>,
    return
  }
  func.func @transform_0(%arg0: i32) -> (i32, i32) {
    %c0_i32 = arith.constant 0 : i32
    %c0_i32_0 = arith.constant 0 : i32
    return %arg0, %c0_i32 : i32, i32
  }
  func.func @transform_1(%arg0: i32) -> (i32, i32) {
    %c0_i32 = arith.constant 0 : i32
    %c0_i32_0 = arith.constant 0 : i32
    return %arg0, %c0_i32 : i32, i32
  }
  func.func @transform_2(%arg0: i32) -> (i32, i32) {
    %c0_i32 = arith.constant 0 : i32
    %c0_i32_0 = arith.constant 0 : i32
    %c0_i32_1 = arith.constant 0 : i32
    return %c0_i32, %c0_i32_0 : i32, i32
  }
  func.func @transform_3(%arg0: i32) -> (i32, i32) {
    %c0_i32 = arith.constant 0 : i32
    %c0_i32_0 = arith.constant 0 : i32
    %c0_i32_1 = arith.constant 0 : i32
    return %c0_i32, %c0_i32_0 : i32, i32
  }
  func.func @transform_4(%arg0: i32) -> (i32, i32) {
    %c0_i32 = arith.constant 0 : i32
    %c0_i32_0 = arith.constant 0 : i32
    %c0_i32_1 = arith.constant 0 : i32
    return %c0_i32, %c0_i32_0 : i32, i32
  }
  func.func @transform_5(%arg0: i32) -> (i32, i32) {
    %c0_i32 = arith.constant 0 : i32
    %c0_i32_0 = arith.constant 0 : i32
    %c0_i32_1 = arith.constant 0 : i32
    return %c0_i32, %c0_i32_0 : i32, i32
  }
  func.func @transform_6(%arg0: i32) -> (i32, i32) {
    %c0_i32 = arith.constant 0 : i32
    %c0_i32_0 = arith.constant 0 : i32
    %c0_i32_1 = arith.constant 0 : i32
    return %c0_i32, %c0_i32_0 : i32, i32
  }
  func.func @transform_7(%arg0: i32) -> (i32, i32) {
    %c0_i32 = arith.constant 0 : i32
    %c0_i32_0 = arith.constant 0 : i32
    %c0_i32_1 = arith.constant 0 : i32
    return %c0_i32, %c0_i32_0 : i32, i32
  }
  func.func @transform_8(%arg0: i32) -> (i32, i32) {
    %c0_i32 = arith.constant 0 : i32
    %c0_i32_0 = arith.constant 0 : i32
    %c0_i32_1 = arith.constant 0 : i32
    return %c0_i32, %c0_i32_0 : i32, i32
  }
  func.func @transform_9(%arg0: i32) -> (i32, i32) {
    %c0_i32 = arith.constant 0 : i32
    %c0_i32_0 = arith.constant 0 : i32
    %c0_i32_1 = arith.constant 0 : i32
    return %c0_i32, %c0_i32_0 : i32, i32
  }
  func.func @transform_10(%arg0: i32) -> (i32, i32) {
    %c0_i32 = arith.constant 0 : i32
    %c0_i32_0 = arith.constant 0 : i32
    %c0_i32_1 = arith.constant 0 : i32
    return %c0_i32, %c0_i32_0 : i32, i32
  }
  func.func @transform_11(%arg0: i32) -> (i32, i32) {
    %c0_i32 = arith.constant 0 : i32
    %c0_i32_0 = arith.constant 0 : i32
    %c0_i32_1 = arith.constant 0 : i32
    return %c0_i32, %c0_i32_0 : i32, i32
  }
  func.func @transform_12(%arg0: i32) -> (i32, i32) {
    %c0_i32 = arith.constant 0 : i32
    %c0_i32_0 = arith.constant 0 : i32
    return %c0_i32, %arg0 : i32, i32
  }
}

</mosaic_0001>

<llo_original>
// kernel: tpu_custom_call.1
$region0: #{tpu_custom_call.1}
  #allocation0 [shape = 'u32[]', space=smem, size = 0x4, offset = 0x4, fixed_abs, tag = 'smem constant byte address 0x4 - core index']
  #allocation1 [shape = 'u32[72,128]{1,0:T(1,128)}', space=vmem, size = 0x9000, scoped, tag = 'internal scratch']
  #allocation2 [shape = 'f32[1,1]{1,0:T(1,128)S(1)}', space=vmem, size = 0x200, scoped, tag = 'scoped memory for tpu_custom_call.1']
  %s0 = inlined_call_operand.vmem [shape: f32[256,8], index: 0, kind: input, shape index: {}]
  %s1 = inlined_call_operand.vmem [shape: s32[256,1], index: 1, kind: input, shape index: {}]
  %s2 = inlined_call_operand.vmem [shape: bf16[8,64], index: 2, kind: input, shape index: {}]
  %s3 = inlined_call_operand.vmem [shape: f32[1,64], index: 3, kind: input, shape index: {}]
  %s4 = inlined_call_operand.vmem [shape: bf16[32,32], index: 4, kind: input, shape index: {}]
  %s5 = inlined_call_operand.vmem [shape: f32[1,32], index: 5, kind: input, shape index: {}]
  %s6 = inlined_call_operand.vmem [shape: bf16[32,32], index: 6, kind: input, shape index: {}]
  %s7 = inlined_call_operand.vmem [shape: f32[1,32], index: 7, kind: input, shape index: {}]
  %s8 = inlined_call_operand.vmem [shape: bf16[32,4], index: 8, kind: input, shape index: {}]
  %s9 = inlined_call_operand.vmem [shape: f32[1,4], index: 9, kind: input, shape index: {}]
  %s10 = inlined_call_operand.vmem [shape: bf16[32,1], index: 10, kind: input, shape index: {}]
  %s11 = inlined_call_operand.<no memory space> [shape: f32[1,1], index: 11, kind: input, shape index: {}]
  %s12 = inlined_call_operand.hbm [shape: f32[8,256], index: 12, kind: output, shape index: {}]
  %s13 = sld [smem:[#allocation0]]
  $region81: #{tpu_custom_call.1} parent=0
    _
  %s15 = ssub.s32 1, %s13
  %s16 = scalar_select 0, %s15, %s13
  %v17 = vstv %s11
  %18 = vst [vmem:[#allocation2] sm:$0x1] %v17
  $region1: #{tpu_custom_call.1} parent=0
    #allocation3 [shape = 'u8[8192]{0}', space=vmem, size = 0x2000, scoped, tag = 'output window, operand 0']
    #allocation4 [shape = 's32[2]{0}', space=sflag, size = 0x8, scoped, tag = 'scoped memory for tpu_custom_call.1']
    %19 = vsyncpa [#allocation4], 0
    %s20 = scalar_lea.sflag [#allocation4], 1
    %21 = vsyncpa %s20, 0
    loop: start=0, step=1, limit=4
    $region2: #{tpu_custom_call.1} parent=1 // loop_pre_header
      _
    $region3: #{tpu_custom_call.1} parent=1 // loop_header
      %s23 = sphi 0, %s27
      %p24 = scmp.ge.s32.totalorder %s23, 4
      %s33 = sphi 0, %s35
      %s36 = sphi 0, %s33
      %s37 = sphi 0, %s36
      %s53 = sphi 0, %s37
      %s59 = sphi 0, %s61
      %s62 = sphi 0, %s59
      %s63 = sphi 0, %s62
      %s79 = sphi 0, %s63
      %s83 = sphi 0, %s83
      %s85 = sphi 0, %s83
      %s86 = sphi 0, %s85
      %s100 = sphi 0, %s86
      %s104 = sphi 0, %s104
      %s106 = sphi 0, %s104
      %s107 = sphi 0, %s106
      %s121 = sphi 0, %s107
      %s125 = sphi 0, %s125
      %s127 = sphi 0, %s125
      %s128 = sphi 0, %s127
      %s142 = sphi 0, %s128
      %s146 = sphi 0, %s146
      %s148 = sphi 0, %s146
      %s149 = sphi 0, %s148
      %s163 = sphi 0, %s149
      %s167 = sphi 0, %s167
      %s169 = sphi 0, %s167
      %s170 = sphi 0, %s169
      %s184 = sphi 0, %s170
      %s188 = sphi 0, %s188
      %s190 = sphi 0, %s188
      %s191 = sphi 0, %s190
      %s205 = sphi 0, %s191
      %s209 = sphi 0, %s209
      %s211 = sphi 0, %s209
      %s212 = sphi 0, %s211
      %s226 = sphi 0, %s212
      %s230 = sphi 0, %s230
      %s232 = sphi 0, %s230
      %s233 = sphi 0, %s232
      %s247 = sphi 0, %s233
      %s251 = sphi 0, %s251
      %s253 = sphi 0, %s251
      %s254 = sphi 0, %s253
      %s268 = sphi 0, %s254
      %s272 = sphi 0, %s272
      %s274 = sphi 0, %s272
      %s275 = sphi 0, %s274
      %s289 = sphi 0, %s275
      %s295 = sphi 0, %s297
      %s298 = sphi 0, %s295
      %s299 = sphi 0, %s298
      %s315 = sphi 0, %s299
    $region4: #{tpu_custom_call.1} parent=1 // loop_header_branch
      %26 = sbr.rel (%p24) target = $region8
    $region5: #{tpu_custom_call.1} parent=1 // loop_body
      %s28 = ssub.s32 %s23, 1
      %s29 = ssub.s32 %s23, 2
      %s30 = sadd.s32 %s23, 1
      %s31 = ssub.s32 %s23, %s30
      %p32 = scmp.eq.s32.totalorder %s31, 0
      %s34 = sadd.s32 %s33, 1
      %s35 = scalar_select %p32, %s33, %s34
      %p38 = pneg %p32
      %p39 = scmp.eq.s32.totalorder %s23, 1
      %p40 = por %p38, %p39
      %p41 = scmp.ne.s32.totalorder %s33, %s36
      %p42 = scmp.eq.s32.totalorder %s23, 0
      %p43 = por %p41, %p42
      %p44 = scmp.ne.s32.totalorder %s33, %s36
      %p45 = scmp.eq.s32.totalorder %s28, 1
      %p46 = por %p44, %p45
      %p47 = scmp.ne.s32.totalorder %s36, %s37
      %p48 = scmp.eq.s32.totalorder %s28, 0
      %p49 = por %p47, %p48
      %p50 = scmp.ne.s32.totalorder %s36, %s37
      %p51 = scmp.eq.s32.totalorder %s29, 1
      %p52 = por %p50, %p51
      %p54 = scmp.ne.s32.totalorder %s37, %s53
      %p55 = scmp.eq.s32.totalorder %s29, 0
      %p56 = por %p54, %p55
      %s57 = ssub.s32 %s23, %s30
      %p58 = scmp.eq.s32.totalorder %s57, 0
      %s60 = sadd.s32 %s59, 1
      %s61 = scalar_select %p58, %s59, %s60
      %p64 = pneg %p58
      %p65 = scmp.eq.s32.totalorder %s23, 1
      %p66 = por %p64, %p65
      %p67 = scmp.ne.s32.totalorder %s59, %s62
      %p68 = scmp.eq.s32.totalorder %s23, 0
      %p69 = por %p67, %p68
      %p70 = scmp.ne.s32.totalorder %s59, %s62
      %p71 = scmp.eq.s32.totalorder %s28, 1
      %p72 = por %p70, %p71
      %p73 = scmp.ne.s32.totalorder %s62, %s63
      %p74 = scmp.eq.s32.totalorder %s28, 0
      %p75 = por %p73, %p74
      %p76 = scmp.ne.s32.totalorder %s62, %s63
      %p77 = scmp.eq.s32.totalorder %s29, 1
      %p78 = por %p76, %p77
      %p80 = scmp.ne.s32.totalorder %s63, %s79
      %p81 = scmp.eq.s32.totalorder %s29, 0
      %p82 = por %p80, %p81
      %s84 = sadd.s32 %s83, 1
      %p87 = scmp.eq.s32.totalorder %s23, 1
      %p88 = scmp.ne.s32.totalorder %s83, %s85
      %p89 = scmp.eq.s32.totalorder %s23, 0
      %p90 = por %p88, %p89
      %p91 = scmp.ne.s32.totalorder %s83, %s85
      %p92 = scmp.eq.s32.totalorder %s28, 1
      %p93 = por %p91, %p92
      %p94 = scmp.ne.s32.totalorder %s85, %s86
      %p95 = scmp.eq.s32.totalorder %s28, 0
      %p96 = por %p94, %p95
      %p97 = scmp.ne.s32.totalorder %s85, %s86
      %p98 = scmp.eq.s32.totalorder %s29, 1
      %p99 = por %p97, %p98
      %p101 = scmp.ne.s32.totalorder %s86, %s100
      %p102 = scmp.eq.s32.totalorder %s29, 0
      %p103 = por %p101, %p102
      %s105 = sadd.s32 %s104, 1
      %p108 = scmp.eq.s32.totalorder %s23, 1
      %p109 = scmp.ne.s32.totalorder %s104, %s106
      %p110 = scmp.eq.s32.totalorder %s23, 0
      %p111 = por %p109, %p110
      %p112 = scmp.ne.s32.totalorder %s104, %s106
      %p113 = scmp.eq.s32.totalorder %s28, 1
      %p114 = por %p112, %p113
      %p115 = scmp.ne.s32.totalorder %s106, %s107
      %p116 = scmp.eq.s32.totalorder %s28, 0
      %p117 = por %p115, %p116
      %p118 = scmp.ne.s32.totalorder %s106, %s107
      %p119 = scmp.eq.s32.totalorder %s29, 1
      %p120 = por %p118, %p119
      %p122 = scmp.ne.s32.totalorder %s107, %s121
      %p123 = scmp.eq.s32.totalorder %s29, 0
      %p124 = por %p122, %p123
      %s126 = sadd.s32 %s125, 1
      %p129 = scmp.eq.s32.totalorder %s23, 1
      %p130 = scmp.ne.s32.totalorder %s125, %s127
      %p131 = scmp.eq.s32.totalorder %s23, 0
      %p132 = por %p130, %p131
      %p133 = scmp.ne.s32.totalorder %s125, %s127
      %p134 = scmp.eq.s32.totalorder %s28, 1
      %p135 = por %p133, %p134
      %p136 = scmp.ne.s32.totalorder %s127, %s128
      %p137 = scmp.eq.s32.totalorder %s28, 0
      %p138 = por %p136, %p137
      %p139 = scmp.ne.s32.totalorder %s127, %s128
      %p140 = scmp.eq.s32.totalorder %s29, 1
      %p141 = por %p139, %p140
      %p143 = scmp.ne.s32.totalorder %s128, %s142
      %p144 = scmp.eq.s32.totalorder %s29, 0
      %p145 = por %p143, %p144
      %s147 = sadd.s32 %s146, 1
      %p150 = scmp.eq.s32.totalorder %s23, 1
      %p151 = scmp.ne.s32.totalorder %s146, %s148
      %p152 = scmp.eq.s32.totalorder %s23, 0
      %p153 = por %p151, %p152
      %p154 = scmp.ne.s32.totalorder %s146, %s148
      %p155 = scmp.eq.s32.totalorder %s28, 1
      %p156 = por %p154, %p155
      %p157 = scmp.ne.s32.totalorder %s148, %s149
      %p158 = scmp.eq.s32.totalorder %s28, 0
      %p159 = por %p157, %p158
      %p160 = scmp.ne.s32.totalorder %s148, %s149
      %p161 = scmp.eq.s32.totalorder %s29, 1
      %p162 = por %p160, %p161
      %p164 = scmp.ne.s32.totalorder %s149, %s163
      %p165 = scmp.eq.s32.totalorder %s29, 0
      %p166 = por %p164, %p165
      %s168 = sadd.s32 %s167, 1
      %p171 = scmp.eq.s32.totalorder %s23, 1
      %p172 = scmp.ne.s32.totalorder %s167, %s169
      %p173 = scmp.eq.s32.totalorder %s23, 0
      %p174 = por %p172, %p173
      %p175 = scmp.ne.s32.totalorder %s167, %s169
      %p176 = scmp.eq.s32.totalorder %s28, 1
      %p177 = por %p175, %p176
      %p178 = scmp.ne.s32.totalorder %s169, %s170
      %p179 = scmp.eq.s32.totalorder %s28, 0
      %p180 = por %p178, %p179
      %p181 = scmp.ne.s32.totalorder %s169, %s170
      %p182 = scmp.eq.s32.totalorder %s29, 1
      %p183 = por %p181, %p182
      %p185 = scmp.ne.s32.totalorder %s170, %s184
      %p186 = scmp.eq.s32.totalorder %s29, 0
      %p187 = por %p185, %p186
      %s189 = sadd.s32 %s188, 1
      %p192 = scmp.eq.s32.totalorder %s23, 1
      %p193 = scmp.ne.s32.totalorder %s188, %s190
      %p194 = scmp.eq.s32.totalorder %s23, 0
      %p195 = por %p193, %p194
      %p196 = scmp.ne.s32.totalorder %s188, %s190
      %p197 = scmp.eq.s32.totalorder %s28, 1
      %p198 = por %p196, %p197
      %p199 = scmp.ne.s32.totalorder %s190, %s191
      %p200 = scmp.eq.s32.totalorder %s28, 0
      %p201 = por %p199, %p200
      %p202 = scmp.ne.s32.totalorder %s190, %s191
      %p203 = scmp.eq.s32.totalorder %s29, 1
      %p204 = por %p202, %p203
      %p206 = scmp.ne.s32.totalorder %s191, %s205
      %p207 = scmp.eq.s32.totalorder %s29, 0
      %p208 = por %p206, %p207
      %s210 = sadd.s32 %s209, 1
      %p213 = scmp.eq.s32.totalorder %s23, 1
      %p214 = scmp.ne.s32.totalorder %s209, %s211
      %p215 = scmp.eq.s32.totalorder %s23, 0
      %p216 = por %p214, %p215
      %p217 = scmp.ne.s32.totalorder %s209, %s211
      %p218 = scmp.eq.s32.totalorder %s28, 1
      %p219 = por %p217, %p218
      %p220 = scmp.ne.s32.totalorder %s211, %s212
      %p221 = scmp.eq.s32.totalorder %s28, 0
      %p222 = por %p220, %p221
      %p223 = scmp.ne.s32.totalorder %s211, %s212
      %p224 = scmp.eq.s32.totalorder %s29, 1
      %p225 = por %p223, %p224
      %p227 = scmp.ne.s32.totalorder %s212, %s226
      %p228 = scmp.eq.s32.totalorder %s29, 0
      %p229 = por %p227, %p228
      %s231 = sadd.s32 %s230, 1
      %p234 = scmp.eq.s32.totalorder %s23, 1
      %p235 = scmp.ne.s32.totalorder %s230, %s232
      %p236 = scmp.eq.s32.totalorder %s23, 0
      %p237 = por %p235, %p236
      %p238 = scmp.ne.s32.totalorder %s230, %s232
      %p239 = scmp.eq.s32.totalorder %s28, 1
      %p240 = por %p238, %p239
      %p241 = scmp.ne.s32.totalorder %s232, %s233
      %p242 = scmp.eq.s32.totalorder %s28, 0
      %p243 = por %p241, %p242
      %p244 = scmp.ne.s32.totalorder %s232, %s233
      %p245 = scmp.eq.s32.totalorder %s29, 1
      %p246 = por %p244, %p245
      %p248 = scmp.ne.s32.totalorder %s233, %s247
      %p249 = scmp.eq.s32.totalorder %s29, 0
      %p250 = por %p248, %p249
      %s252 = sadd.s32 %s251, 1
      %p255 = scmp.eq.s32.totalorder %s23, 1
      %p256 = scmp.ne.s32.totalorder %s251, %s253
      %p257 = scmp.eq.s32.totalorder %s23, 0
      %p258 = por %p256, %p257
      %p259 = scmp.ne.s32.totalorder %s251, %s253
      %p260 = scmp.eq.s32.totalorder %s28, 1
      %p261 = por %p259, %p260
      %p262 = scmp.ne.s32.totalorder %s253, %s254
      %p263 = scmp.eq.s32.totalorder %s28, 0
      %p264 = por %p262, %p263
      %p265 = scmp.ne.s32.totalorder %s253, %s254
      %p266 = scmp.eq.s32.totalorder %s29, 1
      %p267 = por %p265, %p266
      %p269 = scmp.ne.s32.totalorder %s254, %s268
      %p270 = scmp.eq.s32.totalorder %s29, 0
      %p271 = por %p269, %p270
      %s273 = sadd.s32 %s272, 1
      %p276 = scmp.eq.s32.totalorder %s23, 1
      %p277 = scmp.ne.s32.totalorder %s272, %s274
      %p278 = scmp.eq.s32.totalorder %s23, 0
      %p279 = por %p277, %p278
      %p280 = scmp.ne.s32.totalorder %s272, %s274
      %p281 = scmp.eq.s32.totalorder %s28, 1
      %p282 = por %p280, %p281
      %p283 = scmp.ne.s32.totalorder %s274, %s275
      %p284 = scmp.eq.s32.totalorder %s28, 0
      %p285 = por %p283, %p284
      %p286 = scmp.ne.s32.totalorder %s274, %s275
      %p287 = scmp.eq.s32.totalorder %s29, 1
      %p288 = por %p286, %p287
      %p290 = scmp.ne.s32.totalorder %s275, %s289
      %p291 = scmp.eq.s32.totalorder %s29, 0
      %p292 = por %p290, %p291
      %s293 = ssub.s32 %s23, %s30
      %p294 = scmp.eq.s32.totalorder %s293, 0
      %s296 = sadd.s32 %s295, 1
      %s297 = scalar_select %p294, %s295, %s296
      %p300 = pneg %p294
      %p301 = scmp.eq.s32.totalorder %s23, 1
      %p302 = por %p300, %p301
      %p303 = scmp.ne.s32.totalorder %s295, %s298
      %p304 = scmp.eq.s32.totalorder %s23, 0
      %p305 = por %p303, %p304
      %p306 = scmp.ne.s32.totalorder %s295, %s298
      %p307 = scmp.eq.s32.totalorder %s28, 1
      %p308 = por %p306, %p307
      %p309 = scmp.ne.s32.totalorder %s298, %s299
      %p310 = scmp.eq.s32.totalorder %s28, 0
      %p311 = por %p309, %p310
      %p312 = scmp.ne.s32.totalorder %s298, %s299
      %p313 = scmp.eq.s32.totalorder %s29, 1
      %p314 = por %p312, %p313
      %p316 = scmp.ne.s32.totalorder %s299, %s315
      %p317 = scmp.eq.s32.totalorder %s29, 0
      %p318 = por %p316, %p317
      %p319 = scmp.le.s32.totalorder 1, %s23
      %p320 = scmp.lt.s32.totalorder %s23, 3
      %p321 = pnand %p319, %p320
      %p322 = pneg %p321
      // Predicated region
      $region9: #{tpu_custom_call.1} parent=5 // pred_check
        _
      $region10: #{tpu_custom_call.1} parent=5 // pred_check_branch
        %324 = sbr.rel (%p321) target = $region12
      $region11: #{tpu_custom_call.1} parent=5 // pred_region
        %s325 = ssub.s32 %s23, 1
        // Predicated region
        $region13: #{tpu_custom_call.1} parent=11 // pred_check
          %p326 = pneg %p96
        $region14: #{tpu_custom_call.1} parent=11 // pred_check_branch
          %328 = sbr.rel (%p326) target = $region16
        $region15: #{tpu_custom_call.1} parent=11 // pred_region
          _
        $region16: #{tpu_custom_call.1} parent=11 // pred_fallthru
          _
        // Predicated region
        $region17: #{tpu_custom_call.1} parent=11 // pred_check
          %p329 = pneg %p117
        $region18: #{tpu_custom_call.1} parent=11 // pred_check_branch
          %331 = sbr.rel (%p329) target = $region20
        $region19: #{tpu_custom_call.1} parent=11 // pred_region
          _
        $region20: #{tpu_custom_call.1} parent=11 // pred_fallthru
          _
        // Predicated region
        $region21: #{tpu_custom_call.1} parent=11 // pred_check
          %p332 = pneg %p138
        $region22: #{tpu_custom_call.1} parent=11 // pred_check_branch
          %334 = sbr.rel (%p332) target = $region24
        $region23: #{tpu_custom_call.1} parent=11 // pred_region
          _
        $region24: #{tpu_custom_call.1} parent=11 // pred_fallthru
          _
        // Predicated region
        $region25: #{tpu_custom_call.1} parent=11 // pred_check
          %p335 = pneg %p159
        $region26: #{tpu_custom_call.1} parent=11 // pred_check_branch
          %337 = sbr.rel (%p335) target = $region28
        $region27: #{tpu_custom_call.1} parent=11 // pred_region
          _
        $region28: #{tpu_custom_call.1} parent=11 // pred_fallthru
          _
        // Predicated region
        $region29: #{tpu_custom_call.1} parent=11 // pred_check
          %p338 = pneg %p180
        $region30: #{tpu_custom_call.1} parent=11 // pred_check_branch
          %340 = sbr.rel (%p338) target = $region32
        $region31: #{tpu_custom_call.1} parent=11 // pred_region
          _
        $region32: #{tpu_custom_call.1} parent=11 // pred_fallthru
          _
        // Predicated region
        $region33: #{tpu_custom_call.1} parent=11 // pred_check
          %p341 = pneg %p201
        $region34: #{tpu_custom_call.1} parent=11 // pred_check_branch
          %343 = sbr.rel (%p341) target = $region36
        $region35: #{tpu_custom_call.1} parent=11 // pred_region
          _
        $region36: #{tpu_custom_call.1} parent=11 // pred_fallthru
          _
        // Predicated region
        $region37: #{tpu_custom_call.1} parent=11 // pred_check
          %p344 = pneg %p222
        $region38: #{tpu_custom_call.1} parent=11 // pred_check_branch
          %346 = sbr.rel (%p344) target = $region40
        $region39: #{tpu_custom_call.1} parent=11 // pred_region
          _
        $region40: #{tpu_custom_call.1} parent=11 // pred_fallthru
          _
        // Predicated region
        $region41: #{tpu_custom_call.1} parent=11 // pred_check
          %p347 = pneg %p243
        $region42: #{tpu_custom_call.1} parent=11 // pred_check_branch
          %349 = sbr.rel (%p347) target = $region44
        $region43: #{tpu_custom_call.1} parent=11 // pred_region
          _
        $region44: #{tpu_custom_call.1} parent=11 // pred_fallthru
          _
        // Predicated region
        $region45: #{tpu_custom_call.1} parent=11 // pred_check
          %p350 = pneg %p264
        $region46: #{tpu_custom_call.1} parent=11 // pred_check_branch
          %352 = sbr.rel (%p350) target = $region48
        $region47: #{tpu_custom_call.1} parent=11 // pred_region
          _
        $region48: #{tpu_custom_call.1} parent=11 // pred_fallthru
          _
        // Predicated region
        $region49: #{tpu_custom_call.1} parent=11 // pred_check
          %p353 = pneg %p285
        $region50: #{tpu_custom_call.1} parent=11 // pred_check_branch
          %355 = sbr.rel (%p353) target = $region52
        $region51: #{tpu_custom_call.1} parent=11 // pred_region
          _
        $region52: #{tpu_custom_call.1} parent=11 // pred_fallthru
          _
      $region12: #{tpu_custom_call.1} parent=5 // pred_fallthru
        _
      %p356 = scmp.lt.s32.totalorder %s23, 2
      // Predicated region
      $region53: #{tpu_custom_call.1} parent=5 // pred_check
        %p357 = pneg %p356
      $region54: #{tpu_custom_call.1} parent=5 // pred_check_branch
        %359 = sbr.rel (%p357) target = $region56
      $region55: #{tpu_custom_call.1} parent=5 // pred_region
        // Predicated region
        $region57: #{tpu_custom_call.1} parent=55 // pred_check
          %p360 = pneg %p43
        $region58: #{tpu_custom_call.1} parent=55 // pred_check_branch
          %362 = sbr.rel (%p360) target = $region60
        $region59: #{tpu_custom_call.1} parent=55 // pred_region
          %s363 = smul.u32 16, %s23
          %p364 = scmp.lt.s32.totalorder %s363, 31
          %s365 = scalar_select %p364, %s363, 31
          %s366 = smul.addr %s365, 8
          %s367 = scalar_lea.vmem %s0, %s366
          %s368 = smul.u32 16, %s23
        $region60: #{tpu_custom_call.1} parent=55 // pred_fallthru
          _
        // Predicated region
        $region61: #{tpu_custom_call.1} parent=55 // pred_check
          %p369 = pneg %p69
        $region62: #{tpu_custom_call.1} parent=55 // pred_check_branch
          %371 = sbr.rel (%p369) target = $region64
        $region63: #{tpu_custom_call.1} parent=55 // pred_region
          %s372 = smul.u32 16, %s23
          %p373 = scmp.lt.s32.totalorder %s372, 31
          %s374 = scalar_select %p373, %s372, 31
          %s375 = smul.addr %s374, 8
          %s376 = scalar_lea.vmem %s1, %s375
          %s377 = smul.u32 16, %s23
        $region64: #{tpu_custom_call.1} parent=55 // pred_fallthru
          _
      $region56: #{tpu_custom_call.1} parent=5 // pred_fallthru
        _
      %p378 = scmp.le.s32.totalorder 1, %s23
      %p379 = scmp.lt.s32.totalorder %s23, 3
      %p380 = pnand %p378, %p379
      %p381 = pneg %p380
      // Predicated region
      $region65: #{tpu_custom_call.1} parent=5 // pred_check
        _
      $region66: #{tpu_custom_call.1} parent=5 // pred_check_branch
        %383 = sbr.rel (%p380) target = $region68
      $region67: #{tpu_custom_call.1} parent=5 // pred_region
        %s384 = ssub.s32 %s23, 1
        %s385 = smul.u32 16, %s28
        %p386 = scmp.lt.s32.totalorder %s385, 31
        %s387 = scalar_select %p386, %s385, 31
        %s388 = smul.addr %s387, 8
        %s389 = scalar_lea.vmem %s0, %s388
        %p390 = pneg %p49
        %p391 = pneg %p46
        %s392 = smul.u32 16, %s28
        %p393 = scmp.lt.s32.totalorder %s392, 31
        %s394 = scalar_select %p393, %s392, 31
        %s395 = smul.addr %s394, 8
        %s396 = scalar_lea.vmem %s1, %s395
        %p397 = pneg %p75
        %p398 = pneg %p72
        %p399 = pneg %p96
        %p400 = pneg %p93
        %p401 = pneg %p117
        %p402 = pneg %p114
        %p403 = pneg %p138
        %p404 = pneg %p135
        %p405 = pneg %p159
        %p406 = pneg %p156
        %p407 = pneg %p180
        %p408 = pneg %p177
        %p409 = pneg %p201
        %p410 = pneg %p198
        %p411 = pneg %p222
        %p412 = pneg %p219
        %p413 = pneg %p243
        %p414 = pneg %p240
        %p415 = pneg %p264
        %p416 = pneg %p261
        %p417 = pneg %p285
        %p418 = pneg %p282
        %p419 = pneg %p311
        %p420 = pneg %p308
        %s421 = sand.u32 %s298, 1
        %s422 = scalar_lea.sflag [#allocation4], %s421
        %s423 = sand.u32 %s298, 1
        %s424 = smul.addr %s423, 8
        %s425 = scalar_lea.vmem [#allocation3], %s424
        %s426 = smul.u32 16, %s28
        %p427 = scmp.lt.s32.totalorder %s426, 31
        %s428 = scalar_select %p427, %s426, 31
        %s429 = smul.addr %s428, 8
        %s430 = scalar_lea.vmem %s0, %s429
        %s431 = smul.u32 16, %s28
        %s432 = smul.u32 16, %s28
        %p433 = scmp.lt.s32.totalorder %s432, 31
        %s434 = scalar_select %p433, %s432, 31
        %s435 = smul.addr %s434, 8
        %s436 = scalar_lea.vmem %s1, %s435
        %s437 = smul.u32 16, %s28
        %v439 = vld [vmem:[%s430] sm:$0xff]
        %v440 = vld [vmem:[%s430 + $0x8] sm:$0xff]
        %v441 = vld [vmem:[%s430 + $0x10] sm:$0xff]
        %v442 = vld [vmem:[%s430 + $0x18] sm:$0xff]
        %v443 = vld [vmem:[%s430 + $0x20] sm:$0xff]
        %v444 = vld [vmem:[%s430 + $0x28] sm:$0xff]
        %v445 = vld [vmem:[%s430 + $0x30] sm:$0xff]
        %v446 = vld [vmem:[%s430 + $0x38] sm:$0xff]
        %v447 = vld [vmem:[%s430 + $0x40] sm:$0xff]
        %v448 = vld [vmem:[%s430 + $0x48] sm:$0xff]
        %v449 = vld [vmem:[%s430 + $0x50] sm:$0xff]
        %v450 = vld [vmem:[%s430 + $0x58] sm:$0xff]
        %v451 = vld [vmem:[%s430 + $0x60] sm:$0xff]
        %v452 = vld [vmem:[%s430 + $0x68] sm:$0xff]
        %v453 = vld [vmem:[%s430 + $0x70] sm:$0xff]
        %v454 = vld [vmem:[%s430 + $0x78] sm:$0xff]
        %v455 = vpack.c.bf16 %v440, %v439
        %v456 = vpack.c.bf16 %v442, %v441
        %v457 = vpack.c.bf16 %v444, %v443
        %v458 = vpack.c.bf16 %v446, %v445
        %v459 = vpack.c.bf16 %v448, %v447
        %v460 = vpack.c.bf16 %v450, %v449
        %v461 = vpack.c.bf16 %v452, %v451
        %v462 = vpack.c.bf16 %v454, %v453
        %v463 = vld [vmem:[%s2] sm:$0xf]
        %v464 = vld [vmem:[%s3] sm:$0x1]
        %v466 = vperm.slane %v464, 0
        %vm468 = vcmask 64512
        %v470 = vsel %vm468, %v455, 0
        %v473 = vsel %vm468, %v456, 0
        %v476 = vsel %vm468, %v457, 0
        %v479 = vsel %vm468, %v458, 0
        %v482 = vsel %vm468, %v459, 0
        %v485 = vsel %vm468, %v460, 0
        %v488 = vsel %vm468, %v461, 0
        %v491 = vsel %vm468, %v462, 0
        %vm493 = vcmask 1043456
        %v495 = vsel %vm493, %v463, 0
        %497 = vmatpush.bf16.msra.mxu0 0
        %498 = vmatpush.bf16.msra.mxu0 0
        %499 = vmatpush.bf16.msra.mxu0 0
        %500 = vmatpush.bf16.msra.mxu0 0
        %501 = vmatpush.bf16.msra.mxu0 0
        %502 = vmatpush.bf16.msra.mxu0 0
        %503 = vmatpush.bf16.msra.mxu0 0
        %504 = vmatpush.bf16.msra.mxu0 %v495
        %505 = vmatmul.bf16.gmra.mxu0 %v470
        %v506 = vpop.f32.mrf.mxu0
        %v507 = vadd.f32 %v466, %v506
        %v508 = vpop.f32.mrf.mxu0
        %v509 = vadd.f32 %v466, %v508
        %510 = vmatmul.bf16.gmra.mxu0 %v473
        %v511 = vpop.f32.mrf.mxu0
        %v512 = vadd.f32 %v466, %v511
        %v513 = vpop.f32.mrf.mxu0
        %v514 = vadd.f32 %v466, %v513
        %515 = vmatmul.bf16.gmra.mxu0 %v476
        %v516 = vpop.f32.mrf.mxu0
        %v517 = vadd.f32 %v466, %v516
        %v518 = vpop.f32.mrf.mxu0
        %v519 = vadd.f32 %v466, %v518
        %520 = vmatmul.bf16.gmra.mxu0 %v479
        %v521 = vpop.f32.mrf.mxu0
        %v522 = vadd.f32 %v466, %v521
        %v523 = vpop.f32.mrf.mxu0
        %v524 = vadd.f32 %v466, %v523
        %525 = vmatmul.bf16.gmra.mxu0 %v482
        %v526 = vpop.f32.mrf.mxu0
        %v527 = vadd.f32 %v466, %v526
        %v528 = vpop.f32.mrf.mxu0
        %v529 = vadd.f32 %v466, %v528
        %530 = vmatmul.bf16.gmra.mxu0 %v485
        %v531 = vpop.f32.mrf.mxu0
        %v532 = vadd.f32 %v466, %v531
        %v533 = vpop.f32.mrf.mxu0
        %v534 = vadd.f32 %v466, %v533
        %535 = vmatmul.bf16.gmra.mxu0 %v488
        %v536 = vpop.f32.mrf.mxu0
        %v537 = vadd.f32 %v466, %v536
        %v538 = vpop.f32.mrf.mxu0
        %v539 = vadd.f32 %v466, %v538
        %540 = vmatmul.bf16.gmra.mxu0 %v491
        %v541 = vpop.f32.mrf.mxu0
        %v542 = vadd.f32 %v466, %v541
        %v543 = vpop.f32.mrf.mxu0
        %v544 = vadd.f32 %v466, %v543
        %545 = vdwg.mxu0
        %v546 = vtanh.pop %v507
        %v547 = vtanh.pop %v509
        %v548 = vtanh.pop %v512
        %v549 = vtanh.pop %v514
        %v550 = vtanh.pop %v517
        %v551 = vtanh.pop %v519
        %v552 = vtanh.pop %v522
        %v553 = vtanh.pop %v524
        %v554 = vtanh.pop %v527
        %v555 = vtanh.pop %v529
        %v556 = vtanh.pop %v532
        %v557 = vtanh.pop %v534
        %v558 = vtanh.pop %v537
        %v559 = vtanh.pop %v539
        %v560 = vtanh.pop %v542
        %v561 = vtanh.pop %v544
        %v562 = vpack.c.bf16 %v546, %v546
        %v563 = vpack.c.bf16 %v547, %v547
        %v564 = vpack.c.bf16 %v548, %v548
        %v565 = vpack.c.bf16 %v549, %v549
        %v566 = vpack.c.bf16 %v550, %v550
        %v567 = vpack.c.bf16 %v551, %v551
        %v568 = vpack.c.bf16 %v552, %v552
        %v569 = vpack.c.bf16 %v553, %v553
        %v570 = vpack.c.bf16 %v554, %v554
        %v571 = vpack.c.bf16 %v555, %v555
        %v572 = vpack.c.bf16 %v556, %v556
        %v573 = vpack.c.bf16 %v557, %v557
        %v574 = vpack.c.bf16 %v558, %v558
        %v575 = vpack.c.bf16 %v559, %v559
        %v576 = vpack.c.bf16 %v560, %v560
        %v577 = vpack.c.bf16 %v561, %v561
        %v578 = vld [vmem:[%s4] sm:$0xf]
        %v579 = vld [vmem:[%s4 + $0x4] sm:$0xf]
        %v580 = vld [vmem:[%s4 + $0x8] sm:$0xf]
        %v581 = vld [vmem:[%s4 + $0xc] sm:$0xf]
        %v582 = vld [vmem:[%s5] sm:$0x1]
        %v584 = vperm.slane %v582, 0
        %v602 = vunpack.c.l.b16 %v562
        %v603 = vunpack.c.l.b16 %v563
        %v604 = vunpack.c.l.b16 %v564
        %v605 = vunpack.c.l.b16 %v565
        %v606 = vunpack.c.l.b16 %v566
        %v607 = vunpack.c.l.b16 %v567
        %v608 = vunpack.c.l.b16 %v568
        %v609 = vunpack.c.l.b16 %v569
        %v610 = vunpack.c.l.b16 %v570
        %v611 = vunpack.c.l.b16 %v571
        %v612 = vunpack.c.l.b16 %v572
        %v613 = vunpack.c.l.b16 %v573
        %v614 = vunpack.c.l.b16 %v574
        %v615 = vunpack.c.l.b16 %v575
        %v616 = vunpack.c.l.b16 %v576
        %v617 = vunpack.c.l.b16 %v577
        %v618 = vpack.c.b16 %v603, %v602
        %v619 = vpack.c.b16 %v605, %v604
        %v620 = vpack.c.b16 %v607, %v606
        %v621 = vpack.c.b16 %v609, %v608
        %v622 = vpack.c.b16 %v611, %v610
        %v623 = vpack.c.b16 %v613, %v612
        %v624 = vpack.c.b16 %v615, %v614
        %v625 = vpack.c.b16 %v617, %v616
        %v630 = vunpack.c.l.b16 %v578
        %v631 = vunpack.c.l.b16 %v579
        %v632 = vunpack.c.l.b16 %v580
        %v633 = vunpack.c.l.b16 %v581
        %v634 = vpack.c.b16 %v631, %v630
        %v635 = vpack.c.b16 %v633, %v632
        %vm638 = vcmask 261120
        %v640 = vsel %vm638, %v618, 0
        %v643 = vsel %vm638, %v619, 0
        %v646 = vsel %vm638, %v620, 0
        %v649 = vsel %vm638, %v621, 0
        %v652 = vsel %vm638, %v622, 0
        %v655 = vsel %vm638, %v623, 0
        %v658 = vsel %vm638, %v624, 0
        %v661 = vsel %vm638, %v625, 0
        %663 = vmatpush.bf16.msra.mxu0 0
        %664 = vmatpush.bf16.msra.mxu0 0
        %665 = vmatpush.bf16.msra.mxu0 0
        %666 = vmatpush.bf16.msra.mxu0 0
        %667 = vmatpush.bf16.msra.mxu0 0
        %668 = vmatpush.bf16.msra.mxu0 0
        %669 = vmatpush.bf16.msra.mxu0 %v635
        %670 = vmatpush.bf16.msra.mxu0 %v634
        %671 = vmatmul.bf16.gmra.mxu0 %v640
        %v672 = vpop.f32.mrf.mxu0
        %v673 = vadd.f32 %v584, %v672
        %v674 = vpop.f32.mrf.mxu0
        %v675 = vadd.f32 %v584, %v674
        %676 = vmatmul.bf16.gmra.mxu0 %v643
        %v677 = vpop.f32.mrf.mxu0
        %v678 = vadd.f32 %v584, %v677
        %v679 = vpop.f32.mrf.mxu0
        %v680 = vadd.f32 %v584, %v679
        %681 = vmatmul.bf16.gmra.mxu0 %v646
        %v682 = vpop.f32.mrf.mxu0
        %v683 = vadd.f32 %v584, %v682
        %v684 = vpop.f32.mrf.mxu0
        %v685 = vadd.f32 %v584, %v684
        %686 = vmatmul.bf16.gmra.mxu0 %v649
        %v687 = vpop.f32.mrf.mxu0
        %v688 = vadd.f32 %v584, %v687
        %v689 = vpop.f32.mrf.mxu0
        %v690 = vadd.f32 %v584, %v689
        %691 = vmatmul.bf16.gmra.mxu0 %v652
        %v692 = vpop.f32.mrf.mxu0
        %v693 = vadd.f32 %v584, %v692
        %v694 = vpop.f32.mrf.mxu0
        %v695 = vadd.f32 %v584, %v694
        %696 = vmatmul.bf16.gmra.mxu0 %v655
        %v697 = vpop.f32.mrf.mxu0
        %v698 = vadd.f32 %v584, %v697
        %v699 = vpop.f32.mrf.mxu0
        %v700 = vadd.f32 %v584, %v699
        %701 = vmatmul.bf16.gmra.mxu0 %v658
        %v702 = vpop.f32.mrf.mxu0
        %v703 = vadd.f32 %v584, %v702
        %v704 = vpop.f32.mrf.mxu0
        %v705 = vadd.f32 %v584, %v704
        %706 = vmatmul.bf16.gmra.mxu0 %v661
        %v707 = vpop.f32.mrf.mxu0
        %v708 = vadd.f32 %v584, %v707
        %v709 = vpop.f32.mrf.mxu0
        %v710 = vadd.f32 %v584, %v709
        %711 = vdwg.mxu0
        %v712 = vtanh.pop %v673
        %v713 = vtanh.pop %v675
        %v714 = vtanh.pop %v678
        %v715 = vtanh.pop %v680
        %v716 = vtanh.pop %v683
        %v717 = vtanh.pop %v685
        %v718 = vtanh.pop %v688
        %v719 = vtanh.pop %v690
        %v720 = vtanh.pop %v693
        %v721 = vtanh.pop %v695
        %v722 = vtanh.pop %v698
        %v723 = vtanh.pop %v700
        %v724 = vtanh.pop %v703
        %v725 = vtanh.pop %v705
        %v726 = vtanh.pop %v708
        %v727 = vtanh.pop %v710
        %v728 = vld [vmem:[%s6] sm:$0xf]
        %v729 = vld [vmem:[%s6 + $0x4] sm:$0xf]
        %v730 = vld [vmem:[%s6 + $0x8] sm:$0xf]
        %v731 = vld [vmem:[%s6 + $0xc] sm:$0xf]
        %v732 = vld [vmem:[%s7] sm:$0x1]
        %v734 = vperm.slane %v732, 0
        %736 = vrot.lane.b32.xlu0 %v618, 96
        %v737 = vpop.permute.xlu0 %736
        %738 = vrot.lane.b32.xlu0 %v619, 96
        %v739 = vpop.permute.xlu0 %738
        %740 = vrot.lane.b32.xlu0 %v620, 96
        %v741 = vpop.permute.xlu0 %740
        %742 = vrot.lane.b32.xlu0 %v621, 96
        %v743 = vpop.permute.xlu0 %742
        %744 = vrot.lane.b32.xlu0 %v622, 96
        %v745 = vpop.permute.xlu0 %744
        %746 = vrot.lane.b32.xlu0 %v623, 96
        %v747 = vpop.permute.xlu0 %746
        %748 = vrot.lane.b32.xlu0 %v624, 96
        %v749 = vpop.permute.xlu0 %748
        %750 = vrot.lane.b32.xlu0 %v625, 96
        %v751 = vpop.permute.xlu0 %750
        %v756 = vunpack.c.l.b16 %v728
        %v757 = vunpack.c.l.b16 %v729
        %v758 = vunpack.c.l.b16 %v730
        %v759 = vunpack.c.l.b16 %v731
        %v760 = vpack.c.b16 %v757, %v756
        %v761 = vpack.c.b16 %v759, %v758
        %v765 = vsel %vm638, %v737, 0
        %v768 = vsel %vm638, %v739, 0
        %v771 = vsel %vm638, %v741, 0
        %v774 = vsel %vm638, %v743, 0
        %v777 = vsel %vm638, %v745, 0
        %v780 = vsel %vm638, %v747, 0
        %v783 = vsel %vm638, %v749, 0
        %v786 = vsel %vm638, %v751, 0
        %788 = vmatpush.bf16.msra.mxu0 0
        %789 = vmatpush.bf16.msra.mxu0 0
        %790 = vmatpush.bf16.msra.mxu0 0
        %791 = vmatpush.bf16.msra.mxu0 0
        %792 = vmatpush.bf16.msra.mxu0 0
        %793 = vmatpush.bf16.msra.mxu0 0
        %794 = vmatpush.bf16.msra.mxu0 %v761
        %795 = vmatpush.bf16.msra.mxu0 %v760
        %796 = vmatmul.bf16.gmra.mxu0 %v765
        %v797 = vpop.f32.mrf.mxu0
        %v798 = vadd.f32 %v734, %v797
        %v799 = vpop.f32.mrf.mxu0
        %v800 = vadd.f32 %v734, %v799
        %801 = vmatmul.bf16.gmra.mxu0 %v768
        %v802 = vpop.f32.mrf.mxu0
        %v803 = vadd.f32 %v734, %v802
        %v804 = vpop.f32.mrf.mxu0
        %v805 = vadd.f32 %v734, %v804
        %806 = vmatmul.bf16.gmra.mxu0 %v771
        %v807 = vpop.f32.mrf.mxu0
        %v808 = vadd.f32 %v734, %v807
        %v809 = vpop.f32.mrf.mxu0
        %v810 = vadd.f32 %v734, %v809
        %811 = vmatmul.bf16.gmra.mxu0 %v774
        %v812 = vpop.f32.mrf.mxu0
        %v813 = vadd.f32 %v734, %v812
        %v814 = vpop.f32.mrf.mxu0
        %v815 = vadd.f32 %v734, %v814
        %816 = vmatmul.bf16.gmra.mxu0 %v777
        %v817 = vpop.f32.mrf.mxu0
        %v818 = vadd.f32 %v734, %v817
        %v819 = vpop.f32.mrf.mxu0
        %v820 = vadd.f32 %v734, %v819
        %821 = vmatmul.bf16.gmra.mxu0 %v780
        %v822 = vpop.f32.mrf.mxu0
        %v823 = vadd.f32 %v734, %v822
        %v824 = vpop.f32.mrf.mxu0
        %v825 = vadd.f32 %v734, %v824
        %826 = vmatmul.bf16.gmra.mxu0 %v783
        %v827 = vpop.f32.mrf.mxu0
        %v828 = vadd.f32 %v734, %v827
        %v829 = vpop.f32.mrf.mxu0
        %v830 = vadd.f32 %v734, %v829
        %831 = vmatmul.bf16.gmra.mxu0 %v786
        %v832 = vpop.f32.mrf.mxu0
        %v833 = vadd.f32 %v734, %v832
        %v834 = vpop.f32.mrf.mxu0
        %v835 = vadd.f32 %v734, %v834
        %836 = vdwg.mxu0
        %v837 = vtanh.pop %v798
        %v838 = vtanh.pop %v800
        %v839 = vtanh.pop %v803
        %v840 = vtanh.pop %v805
        %v841 = vtanh.pop %v808
        %v842 = vtanh.pop %v810
        %v843 = vtanh.pop %v813
        %v844 = vtanh.pop %v815
        %v845 = vtanh.pop %v818
        %v846 = vtanh.pop %v820
        %v847 = vtanh.pop %v823
        %v848 = vtanh.pop %v825
        %v849 = vtanh.pop %v828
        %v850 = vtanh.pop %v830
        %v851 = vtanh.pop %v833
        %v852 = vtanh.pop %v835
        %v853 = vpack.c.bf16 %v713, %v712
        %v854 = vpack.c.bf16 %v715, %v714
        %v855 = vpack.c.bf16 %v717, %v716
        %v856 = vpack.c.bf16 %v719, %v718
        %v857 = vpack.c.bf16 %v721, %v720
        %v858 = vpack.c.bf16 %v723, %v722
        %v859 = vpack.c.bf16 %v725, %v724
        %v860 = vpack.c.bf16 %v727, %v726
        %v861 = vld [vmem:[%s8] sm:$0xf]
        %v862 = vld [vmem:[%s8 + $0x4] sm:$0xf]
        %v863 = vld [vmem:[%s8 + $0x8] sm:$0xf]
        %v864 = vld [vmem:[%s8 + $0xc] sm:$0xf]
        %v865 = vld [vmem:[%s9] sm:$0x1]
        %v867 = vperm.slane %v865, 0
        %v873 = vunpack.c.l.b16 %v861
        %v874 = vunpack.c.l.b16 %v862
        %v875 = vunpack.c.l.b16 %v863
        %v876 = vunpack.c.l.b16 %v864
        %v877 = vpack.c.b16 %v874, %v873
        %v878 = vpack.c.b16 %v876, %v875
        %v882 = vsel %vm638, %v853, 0
        %v885 = vsel %vm638, %v854, 0
        %v888 = vsel %vm638, %v855, 0
        %v891 = vsel %vm638, %v856, 0
        %v894 = vsel %vm638, %v857, 0
        %v897 = vsel %vm638, %v858, 0
        %v900 = vsel %vm638, %v859, 0
        %v903 = vsel %vm638, %v860, 0
        %905 = vmatpush.bf16.msra.mxu0 0
        %906 = vmatpush.bf16.msra.mxu0 0
        %907 = vmatpush.bf16.msra.mxu0 0
        %908 = vmatpush.bf16.msra.mxu0 0
        %909 = vmatpush.bf16.msra.mxu0 0
        %910 = vmatpush.bf16.msra.mxu0 0
        %911 = vmatpush.bf16.msra.mxu0 %v878
        %912 = vmatpush.bf16.msra.mxu0 %v877
        %913 = vmatmul.bf16.gmra.mxu0 %v882
        %v914 = vpop.f32.mrf.mxu0
        %v915 = vadd.f32 %v867, %v914
        %v916 = vpop.f32.mrf.mxu0
        %v917 = vadd.f32 %v867, %v916
        %918 = vmatmul.bf16.gmra.mxu0 %v885
        %v919 = vpop.f32.mrf.mxu0
        %v920 = vadd.f32 %v867, %v919
        %v921 = vpop.f32.mrf.mxu0
        %v922 = vadd.f32 %v867, %v921
        %923 = vmatmul.bf16.gmra.mxu0 %v888
        %v924 = vpop.f32.mrf.mxu0
        %v925 = vadd.f32 %v867, %v924
        %v926 = vpop.f32.mrf.mxu0
        %v927 = vadd.f32 %v867, %v926
        %928 = vmatmul.bf16.gmra.mxu0 %v891
        %v929 = vpop.f32.mrf.mxu0
        %v930 = vadd.f32 %v867, %v929
        %v931 = vpop.f32.mrf.mxu0
        %v932 = vadd.f32 %v867, %v931
        %933 = vmatmul.bf16.gmra.mxu0 %v894
        %v934 = vpop.f32.mrf.mxu0
        %v935 = vadd.f32 %v867, %v934
        %v936 = vpop.f32.mrf.mxu0
        %v937 = vadd.f32 %v867, %v936
        %938 = vmatmul.bf16.gmra.mxu0 %v897
        %v939 = vpop.f32.mrf.mxu0
        %v940 = vadd.f32 %v867, %v939
        %v941 = vpop.f32.mrf.mxu0
        %v942 = vadd.f32 %v867, %v941
        %943 = vmatmul.bf16.gmra.mxu0 %v900
        %v944 = vpop.f32.mrf.mxu0
        %v945 = vadd.f32 %v867, %v944
        %v946 = vpop.f32.mrf.mxu0
        %v947 = vadd.f32 %v867, %v946
        %948 = vmatmul.bf16.gmra.mxu0 %v903
        %v949 = vpop.f32.mrf.mxu0
        %v950 = vadd.f32 %v867, %v949
        %v951 = vpop.f32.mrf.mxu0
        %v952 = vadd.f32 %v867, %v951
        %953 = vdwg.mxu0
        %v954 = vpack.c.bf16 %v838, %v837
        %v955 = vpack.c.bf16 %v840, %v839
        %v956 = vpack.c.bf16 %v842, %v841
        %v957 = vpack.c.bf16 %v844, %v843
        %v958 = vpack.c.bf16 %v846, %v845
        %v959 = vpack.c.bf16 %v848, %v847
        %v960 = vpack.c.bf16 %v850, %v849
        %v961 = vpack.c.bf16 %v852, %v851
        %v962 = vld [vmem:[%s10] sm:$0xf]
        %v963 = vld [vmem:[%s10 + $0x4] sm:$0xf]
        %v964 = vld [vmem:[%s10 + $0x8] sm:$0xf]
        %v965 = vld [vmem:[%s10 + $0xc] sm:$0xf]
        %v966 = vld [vmem:[#allocation2] sm:$0x1]
        %v968 = vperm.slane %v966, 0
        %v974 = vunpack.c.l.b16 %v962
        %v975 = vunpack.c.l.b16 %v963
        %v976 = vunpack.c.l.b16 %v964
        %v977 = vunpack.c.l.b16 %v965
        %v978 = vpack.c.b16 %v975, %v974
        %v979 = vpack.c.b16 %v977, %v976
        %v983 = vsel %vm638, %v954, 0
        %v986 = vsel %vm638, %v955, 0
        %v989 = vsel %vm638, %v956, 0
        %v992 = vsel %vm638, %v957, 0
        %v995 = vsel %vm638, %v958, 0
        %v998 = vsel %vm638, %v959, 0
        %v1001 = vsel %vm638, %v960, 0
        %v1004 = vsel %vm638, %v961, 0
        %1006 = vmatpush.bf16.msra.mxu0 0
        %1007 = vmatpush.bf16.msra.mxu0 0
        %1008 = vmatpush.bf16.msra.mxu0 0
        %1009 = vmatpush.bf16.msra.mxu0 0
        %1010 = vmatpush.bf16.msra.mxu0 0
        %1011 = vmatpush.bf16.msra.mxu0 0
        %1012 = vmatpush.bf16.msra.mxu0 %v979
        %1013 = vmatpush.bf16.msra.mxu0 %v978
        %1014 = vmatmul.bf16.gmra.mxu0 %v983
        %v1015 = vpop.f32.mrf.mxu0
        %v1016 = vadd.f32 %v968, %v1015
        %v1017 = vpop.f32.mrf.mxu0
        %v1018 = vadd.f32 %v968, %v1017
        %1019 = vmatmul.bf16.gmra.mxu0 %v986
        %v1020 = vpop.f32.mrf.mxu0
        %v1021 = vadd.f32 %v968, %v1020
        %v1022 = vpop.f32.mrf.mxu0
        %v1023 = vadd.f32 %v968, %v1022
        %1024 = vmatmul.bf16.gmra.mxu0 %v989
        %v1025 = vpop.f32.mrf.mxu0
        %v1026 = vadd.f32 %v968, %v1025
        %v1027 = vpop.f32.mrf.mxu0
        %v1028 = vadd.f32 %v968, %v1027
        %1029 = vmatmul.bf16.gmra.mxu0 %v992
        %v1030 = vpop.f32.mrf.mxu0
        %v1031 = vadd.f32 %v968, %v1030
        %v1032 = vpop.f32.mrf.mxu0
        %v1033 = vadd.f32 %v968, %v1032
        %1034 = vmatmul.bf16.gmra.mxu0 %v995
        %v1035 = vpop.f32.mrf.mxu0
        %v1036 = vadd.f32 %v968, %v1035
        %v1037 = vpop.f32.mrf.mxu0
        %v1038 = vadd.f32 %v968, %v1037
        %1039 = vmatmul.bf16.gmra.mxu0 %v998
        %v1040 = vpop.f32.mrf.mxu0
        %v1041 = vadd.f32 %v968, %v1040
        %v1042 = vpop.f32.mrf.mxu0
        %v1043 = vadd.f32 %v968, %v1042
        %1044 = vmatmul.bf16.gmra.mxu0 %v1001
        %v1045 = vpop.f32.mrf.mxu0
        %v1046 = vadd.f32 %v968, %v1045
        %v1047 = vpop.f32.mrf.mxu0
        %v1048 = vadd.f32 %v968, %v1047
        %1049 = vmatmul.bf16.gmra.mxu0 %v1004
        %v1050 = vpop.f32.mrf.mxu0
        %v1051 = vadd.f32 %v968, %v1050
        %v1052 = vpop.f32.mrf.mxu0
        %v1053 = vadd.f32 %v968, %v1052
        %1054 = vdwg.mxu0
        %vm1055 = vcmask 31744
        %v1056 = vsel %vm1055, %v915, -inf
        %1057 = vmax.xlane.f32.xlu0 %v1056
        %v1058 = vpop.xlane.xlu0 %1057
        %v1059 = vsel %vm1055, %v917, -inf
        %1060 = vmax.xlane.f32.xlu0 %v1059
        %v1061 = vpop.xlane.xlu0 %1060
        %v1062 = vsel %vm1055, %v920, -inf
        %1063 = vmax.xlane.f32.xlu0 %v1062
        %v1064 = vpop.xlane.xlu0 %1063
        %v1065 = vsel %vm1055, %v922, -inf
        %1066 = vmax.xlane.f32.xlu0 %v1065
        %v1067 = vpop.xlane.xlu0 %1066
        %v1068 = vsel %vm1055, %v925, -inf
        %1069 = vmax.xlane.f32.xlu0 %v1068
        %v1070 = vpop.xlane.xlu0 %1069
        %v1071 = vsel %vm1055, %v927, -inf
        %1072 = vmax.xlane.f32.xlu0 %v1071
        %v1073 = vpop.xlane.xlu0 %1072
        %v1074 = vsel %vm1055, %v930, -inf
        %1075 = vmax.xlane.f32.xlu0 %v1074
        %v1076 = vpop.xlane.xlu0 %1075
        %v1077 = vsel %vm1055, %v932, -inf
        %1078 = vmax.xlane.f32.xlu0 %v1077
        %v1079 = vpop.xlane.xlu0 %1078
        %v1080 = vsel %vm1055, %v935, -inf
        %1081 = vmax.xlane.f32.xlu0 %v1080
        %v1082 = vpop.xlane.xlu0 %1081
        %v1083 = vsel %vm1055, %v937, -inf
        %1084 = vmax.xlane.f32.xlu0 %v1083
        %v1085 = vpop.xlane.xlu0 %1084
        %v1086 = vsel %vm1055, %v940, -inf
        %1087 = vmax.xlane.f32.xlu0 %v1086
        %v1088 = vpop.xlane.xlu0 %1087
        %v1089 = vsel %vm1055, %v942, -inf
        %1090 = vmax.xlane.f32.xlu0 %v1089
        %v1091 = vpop.xlane.xlu0 %1090
        %v1092 = vsel %vm1055, %v945, -inf
        %1093 = vmax.xlane.f32.xlu0 %v1092
        %v1094 = vpop.xlane.xlu0 %1093
        %v1095 = vsel %vm1055, %v947, -inf
        %1096 = vmax.xlane.f32.xlu0 %v1095
        %v1097 = vpop.xlane.xlu0 %1096
        %v1098 = vsel %vm1055, %v950, -inf
        %1099 = vmax.xlane.f32.xlu0 %v1098
        %v1100 = vpop.xlane.xlu0 %1099
        %v1101 = vsel %vm1055, %v952, -inf
        %1102 = vmax.xlane.f32.xlu0 %v1101
        %v1103 = vpop.xlane.xlu0 %1102
        %v1104 = vsub.f32 %v915, %v1058
        %v1105 = vsub.f32 %v917, %v1061
        %v1106 = vsub.f32 %v920, %v1064
        %v1107 = vsub.f32 %v922, %v1067
        %v1108 = vsub.f32 %v925, %v1070
        %v1109 = vsub.f32 %v927, %v1073
        %v1110 = vsub.f32 %v930, %v1076
        %v1111 = vsub.f32 %v932, %v1079
        %v1112 = vsub.f32 %v935, %v1082
        %v1113 = vsub.f32 %v937, %v1085
        %v1114 = vsub.f32 %v940, %v1088
        %v1115 = vsub.f32 %v942, %v1091
        %v1116 = vsub.f32 %v945, %v1094
        %v1117 = vsub.f32 %v947, %v1097
        %v1118 = vsub.f32 %v950, %v1100
        %v1119 = vsub.f32 %v952, %v1103
        %v1120 = vmul.f32 %v1104, 1.442695
        %v1121 = vpow.pop %v1120
        %v1122 = vmul.f32 %v1105, 1.442695
        %v1123 = vpow.pop %v1122
        %v1124 = vmul.f32 %v1106, 1.442695
        %v1125 = vpow.pop %v1124
        %v1126 = vmul.f32 %v1107, 1.442695
        %v1127 = vpow.pop %v1126
        %v1128 = vmul.f32 %v1108, 1.442695
        %v1129 = vpow.pop %v1128
        %v1130 = vmul.f32 %v1109, 1.442695
        %v1131 = vpow.pop %v1130
        %v1132 = vmul.f32 %v1110, 1.442695
        %v1133 = vpow.pop %v1132
        %v1134 = vmul.f32 %v1111, 1.442695
        %v1135 = vpow.pop %v1134
        %v1136 = vmul.f32 %v1112, 1.442695
        %v1137 = vpow.pop %v1136
        %v1138 = vmul.f32 %v1113, 1.442695
        %v1139 = vpow.pop %v1138
        %v1140 = vmul.f32 %v1114, 1.442695
        %v1141 = vpow.pop %v1140
        %v1142 = vmul.f32 %v1115, 1.442695
        %v1143 = vpow.pop %v1142
        %v1144 = vmul.f32 %v1116, 1.442695
        %v1145 = vpow.pop %v1144
        %v1146 = vmul.f32 %v1117, 1.442695
        %v1147 = vpow.pop %v1146
        %v1148 = vmul.f32 %v1118, 1.442695
        %v1149 = vpow.pop %v1148
        %v1150 = vmul.f32 %v1119, 1.442695
        %v1151 = vpow.pop %v1150
        %v1152 = vsel %vm1055, %v1121, 0.0
        %1153 = vadd.xlane.f32.xlu0 %v1152
        %v1154 = vpop.xlane.xlu0 %1153
        %v1155 = vsel %vm1055, %v1123, 0.0
        %1156 = vadd.xlane.f32.xlu0 %v1155
        %v1157 = vpop.xlane.xlu0 %1156
        %v1158 = vsel %vm1055, %v1125, 0.0
        %1159 = vadd.xlane.f32.xlu0 %v1158
        %v1160 = vpop.xlane.xlu0 %1159
        %v1161 = vsel %vm1055, %v1127, 0.0
        %1162 = vadd.xlane.f32.xlu0 %v1161
        %v1163 = vpop.xlane.xlu0 %1162
        %v1164 = vsel %vm1055, %v1129, 0.0
        %1165 = vadd.xlane.f32.xlu0 %v1164
        %v1166 = vpop.xlane.xlu0 %1165
        %v1167 = vsel %vm1055, %v1131, 0.0
        %1168 = vadd.xlane.f32.xlu0 %v1167
        %v1169 = vpop.xlane.xlu0 %1168
        %v1170 = vsel %vm1055, %v1133, 0.0
        %1171 = vadd.xlane.f32.xlu0 %v1170
        %v1172 = vpop.xlane.xlu0 %1171
        %v1173 = vsel %vm1055, %v1135, 0.0
        %1174 = vadd.xlane.f32.xlu0 %v1173
        %v1175 = vpop.xlane.xlu0 %1174
        %v1176 = vsel %vm1055, %v1137, 0.0
        %1177 = vadd.xlane.f32.xlu0 %v1176
        %v1178 = vpop.xlane.xlu0 %1177
        %v1179 = vsel %vm1055, %v1139, 0.0
        %1180 = vadd.xlane.f32.xlu0 %v1179
        %v1181 = vpop.xlane.xlu0 %1180
        %v1182 = vsel %vm1055, %v1141, 0.0
        %1183 = vadd.xlane.f32.xlu0 %v1182
        %v1184 = vpop.xlane.xlu0 %1183
        %v1185 = vsel %vm1055, %v1143, 0.0
        %1186 = vadd.xlane.f32.xlu0 %v1185
        %v1187 = vpop.xlane.xlu0 %1186
        %v1188 = vsel %vm1055, %v1145, 0.0
        %1189 = vadd.xlane.f32.xlu0 %v1188
        %v1190 = vpop.xlane.xlu0 %1189
        %v1191 = vsel %vm1055, %v1147, 0.0
        %1192 = vadd.xlane.f32.xlu0 %v1191
        %v1193 = vpop.xlane.xlu0 %1192
        %v1194 = vsel %vm1055, %v1149, 0.0
        %1195 = vadd.xlane.f32.xlu0 %v1194
        %v1196 = vpop.xlane.xlu0 %1195
        %v1197 = vsel %vm1055, %v1151, 0.0
        %1198 = vadd.xlane.f32.xlu0 %v1197
        %v1199 = vpop.xlane.xlu0 %1198
        %v1200 = vlog2.pop %v1154
        %v1201 = vmul.f32 %v1200, 0.6931472
        %v1202 = vlog2.pop %v1157
        %v1203 = vmul.f32 %v1202, 0.6931472
        %v1204 = vlog2.pop %v1160
        %v1205 = vmul.f32 %v1204, 0.6931472
        %v1206 = vlog2.pop %v1163
        %v1207 = vmul.f32 %v1206, 0.6931472
        %v1208 = vlog2.pop %v1166
        %v1209 = vmul.f32 %v1208, 0.6931472
        %v1210 = vlog2.pop %v1169
        %v1211 = vmul.f32 %v1210, 0.6931472
        %v1212 = vlog2.pop %v1172
        %v1213 = vmul.f32 %v1212, 0.6931472
        %v1214 = vlog2.pop %v1175
        %v1215 = vmul.f32 %v1214, 0.6931472
        %v1216 = vlog2.pop %v1178
        %v1217 = vmul.f32 %v1216, 0.6931472
        %v1218 = vlog2.pop %v1181
        %v1219 = vmul.f32 %v1218, 0.6931472
        %v1220 = vlog2.pop %v1184
        %v1221 = vmul.f32 %v1220, 0.6931472
        %v1222 = vlog2.pop %v1187
        %v1223 = vmul.f32 %v1222, 0.6931472
        %v1224 = vlog2.pop %v1190
        %v1225 = vmul.f32 %v1224, 0.6931472
        %v1226 = vlog2.pop %v1193
        %v1227 = vmul.f32 %v1226, 0.6931472
        %v1228 = vlog2.pop %v1196
        %v1229 = vmul.f32 %v1228, 0.6931472
        %v1230 = vlog2.pop %v1199
        %v1231 = vmul.f32 %v1230, 0.6931472
        %v1232 = vsub.f32 %v1104, %v1201
        %v1233 = vsub.f32 %v1105, %v1203
        %v1234 = vsub.f32 %v1106, %v1205
        %v1235 = vsub.f32 %v1107, %v1207
        %v1236 = vsub.f32 %v1108, %v1209
        %v1237 = vsub.f32 %v1109, %v1211
        %v1238 = vsub.f32 %v1110, %v1213
        %v1239 = vsub.f32 %v1111, %v1215
        %v1240 = vsub.f32 %v1112, %v1217
        %v1241 = vsub.f32 %v1113, %v1219
        %v1242 = vsub.f32 %v1114, %v1221
        %v1243 = vsub.f32 %v1115, %v1223
        %v1244 = vsub.f32 %v1116, %v1225
        %v1245 = vsub.f32 %v1117, %v1227
        %v1246 = vsub.f32 %v1118, %v1229
        %v1247 = vsub.f32 %v1119, %v1231
        %v1248 = vmul.f32 %v1232, 1.442695
        %v1249 = vpow.pop %v1248
        %v1250 = vmul.f32 %v1233, 1.442695
        %v1251 = vpow.pop %v1250
        %v1252 = vmul.f32 %v1234, 1.442695
        %v1253 = vpow.pop %v1252
        %v1254 = vmul.f32 %v1235, 1.442695
        %v1255 = vpow.pop %v1254
        %v1256 = vmul.f32 %v1236, 1.442695
        %v1257 = vpow.pop %v1256
        %v1258 = vmul.f32 %v1237, 1.442695
        %v1259 = vpow.pop %v1258
        %v1260 = vmul.f32 %v1238, 1.442695
        %v1261 = vpow.pop %v1260
        %v1262 = vmul.f32 %v1239, 1.442695
        %v1263 = vpow.pop %v1262
        %v1264 = vmul.f32 %v1240, 1.442695
        %v1265 = vpow.pop %v1264
        %v1266 = vmul.f32 %v1241, 1.442695
        %v1267 = vpow.pop %v1266
        %v1268 = vmul.f32 %v1242, 1.442695
        %v1269 = vpow.pop %v1268
        %v1270 = vmul.f32 %v1243, 1.442695
        %v1271 = vpow.pop %v1270
        %v1272 = vmul.f32 %v1244, 1.442695
        %v1273 = vpow.pop %v1272
        %v1274 = vmul.f32 %v1245, 1.442695
        %v1275 = vpow.pop %v1274
        %v1276 = vmul.f32 %v1246, 1.442695
        %v1277 = vpow.pop %v1276
        %v1278 = vmul.f32 %v1247, 1.442695
        %v1279 = vpow.pop %v1278
        %v1280 = vld [vmem:[%s436] sm:$0xff]
        %v1281 = vld [vmem:[%s436 + $0x8] sm:$0xff]
        %v1282 = vld [vmem:[%s436 + $0x10] sm:$0xff]
        %v1283 = vld [vmem:[%s436 + $0x18] sm:$0xff]
        %v1284 = vld [vmem:[%s436 + $0x20] sm:$0xff]
        %v1285 = vld [vmem:[%s436 + $0x28] sm:$0xff]
        %v1286 = vld [vmem:[%s436 + $0x30] sm:$0xff]
        %v1287 = vld [vmem:[%s436 + $0x38] sm:$0xff]
        %v1288 = vld [vmem:[%s436 + $0x40] sm:$0xff]
        %v1289 = vld [vmem:[%s436 + $0x48] sm:$0xff]
        %v1290 = vld [vmem:[%s436 + $0x50] sm:$0xff]
        %v1291 = vld [vmem:[%s436 + $0x58] sm:$0xff]
        %v1292 = vld [vmem:[%s436 + $0x60] sm:$0xff]
        %v1293 = vld [vmem:[%s436 + $0x68] sm:$0xff]
        %v1294 = vld [vmem:[%s436 + $0x70] sm:$0xff]
        %v1295 = vld [vmem:[%s436 + $0x78] sm:$0xff]
        %v1296 = vlaneseq
        %v1297 = vand.u32 %v1296, 127
        %1298 = vset.pattern.permute.xlu0 0
        %1299 = vperm.xlu0 %1298, %v1280
        %v1300 = vpop.permute.xlu0 %1299
        %1301 = vset.pattern.permute.xlu0 0
        %1302 = vperm.xlu0 %1301, %v1281
        %v1303 = vpop.permute.xlu0 %1302
        %1304 = vset.pattern.permute.xlu0 0
        %1305 = vperm.xlu0 %1304, %v1282
        %v1306 = vpop.permute.xlu0 %1305
        %1307 = vset.pattern.permute.xlu0 0
        %1308 = vperm.xlu0 %1307, %v1283
        %v1309 = vpop.permute.xlu0 %1308
        %1310 = vset.pattern.permute.xlu0 0
        %1311 = vperm.xlu0 %1310, %v1284
        %v1312 = vpop.permute.xlu0 %1311
        %1313 = vset.pattern.permute.xlu0 0
        %1314 = vperm.xlu0 %1313, %v1285
        %v1315 = vpop.permute.xlu0 %1314
        %1316 = vset.pattern.permute.xlu0 0
        %1317 = vperm.xlu0 %1316, %v1286
        %v1318 = vpop.permute.xlu0 %1317
        %1319 = vset.pattern.permute.xlu0 0
        %1320 = vperm.xlu0 %1319, %v1287
        %v1321 = vpop.permute.xlu0 %1320
        %1322 = vset.pattern.permute.xlu0 0
        %1323 = vperm.xlu0 %1322, %v1288
        %v1324 = vpop.permute.xlu0 %1323
        %1325 = vset.pattern.permute.xlu0 0
        %1326 = vperm.xlu0 %1325, %v1289
        %v1327 = vpop.permute.xlu0 %1326
        %1328 = vset.pattern.permute.xlu0 0
        %1329 = vperm.xlu0 %1328, %v1290
        %v1330 = vpop.permute.xlu0 %1329
        %1331 = vset.pattern.permute.xlu0 0
        %1332 = vperm.xlu0 %1331, %v1291
        %v1333 = vpop.permute.xlu0 %1332
        %1334 = vset.pattern.permute.xlu0 0
        %1335 = vperm.xlu0 %1334, %v1292
        %v1336 = vpop.permute.xlu0 %1335
        %1337 = vset.pattern.permute.xlu0 0
        %1338 = vperm.xlu0 %1337, %v1293
        %v1339 = vpop.permute.xlu0 %1338
        %1340 = vset.pattern.permute.xlu0 0
        %1341 = vperm.xlu0 %1340, %v1294
        %v1342 = vpop.permute.xlu0 %1341
        %1343 = vset.pattern.permute.xlu0 0
        %1344 = vperm.xlu0 %1343, %v1295
        %v1345 = vpop.permute.xlu0 %1344
        %vm1346 = vcmp.eq.s32.totalorder %v1297, %v1300
        %vm1347 = vcmp.eq.s32.totalorder %v1297, %v1303
        %vm1348 = vcmp.eq.s32.totalorder %v1297, %v1306
        %vm1349 = vcmp.eq.s32.totalorder %v1297, %v1309
        %vm1350 = vcmp.eq.s32.totalorder %v1297, %v1312
        %vm1351 = vcmp.eq.s32.totalorder %v1297, %v1315
        %vm1352 = vcmp.eq.s32.totalorder %v1297, %v1318
        %vm1353 = vcmp.eq.s32.totalorder %v1297, %v1321
        %vm1354 = vcmp.eq.s32.totalorder %v1297, %v1324
        %vm1355 = vcmp.eq.s32.totalorder %v1297, %v1327
        %vm1356 = vcmp.eq.s32.totalorder %v1297, %v1330
        %vm1357 = vcmp.eq.s32.totalorder %v1297, %v1333
        %vm1358 = vcmp.eq.s32.totalorder %v1297, %v1336
        %vm1359 = vcmp.eq.s32.totalorder %v1297, %v1339
        %vm1360 = vcmp.eq.s32.totalorder %v1297, %v1342
        %vm1361 = vcmp.eq.s32.totalorder %v1297, %v1345
        %v1362 = vsel %vm1346, 1, 0
        %v1363 = vsel %vm1347, 1, 0
        %v1364 = vsel %vm1348, 1, 0
        %v1365 = vsel %vm1349, 1, 0
        %v1366 = vsel %vm1350, 1, 0
        %v1367 = vsel %vm1351, 1, 0
        %v1368 = vsel %vm1352, 1, 0
        %v1369 = vsel %vm1353, 1, 0
        %v1370 = vsel %vm1354, 1, 0
        %v1371 = vsel %vm1355, 1, 0
        %v1372 = vsel %vm1356, 1, 0
        %v1373 = vsel %vm1357, 1, 0
        %v1374 = vsel %vm1358, 1, 0
        %v1375 = vsel %vm1359, 1, 0
        %v1376 = vsel %vm1360, 1, 0
        %v1377 = vsel %vm1361, 1, 0
        %v1378 = vcvt.s32.f32 %v1362
        %v1379 = vcvt.s32.f32 %v1363
        %v1380 = vcvt.s32.f32 %v1364
        %v1381 = vcvt.s32.f32 %v1365
        %v1382 = vcvt.s32.f32 %v1366
        %v1383 = vcvt.s32.f32 %v1367
        %v1384 = vcvt.s32.f32 %v1368
        %v1385 = vcvt.s32.f32 %v1369
        %v1386 = vcvt.s32.f32 %v1370
        %v1387 = vcvt.s32.f32 %v1371
        %v1388 = vcvt.s32.f32 %v1372
        %v1389 = vcvt.s32.f32 %v1373
        %v1390 = vcvt.s32.f32 %v1374
        %v1391 = vcvt.s32.f32 %v1375
        %v1392 = vcvt.s32.f32 %v1376
        %v1393 = vcvt.s32.f32 %v1377
        %v1394 = vmul.f32 %v1378, %v1232
        %v1395 = vmul.f32 %v1379, %v1233
        %v1396 = vmul.f32 %v1380, %v1234
        %v1397 = vmul.f32 %v1381, %v1235
        %v1398 = vmul.f32 %v1382, %v1236
        %v1399 = vmul.f32 %v1383, %v1237
        %v1400 = vmul.f32 %v1384, %v1238
        %v1401 = vmul.f32 %v1385, %v1239
        %v1402 = vmul.f32 %v1386, %v1240
        %v1403 = vmul.f32 %v1387, %v1241
        %v1404 = vmul.f32 %v1388, %v1242
        %v1405 = vmul.f32 %v1389, %v1243
        %v1406 = vmul.f32 %v1390, %v1244
        %v1407 = vmul.f32 %v1391, %v1245
        %v1408 = vmul.f32 %v1392, %v1246
        %v1409 = vmul.f32 %v1393, %v1247
        %v1410 = vsel %vm1055, %v1394, 0.0
        %1411 = vadd.xlane.f32.xlu0 %v1410
        %v1412 = vpop.xlane.xlu0 %1411
        %v1413 = vsel %vm1055, %v1395, 0.0
        %1414 = vadd.xlane.f32.xlu0 %v1413
        %v1415 = vpop.xlane.xlu0 %1414
        %v1416 = vsel %vm1055, %v1396, 0.0
        %1417 = vadd.xlane.f32.xlu0 %v1416
        %v1418 = vpop.xlane.xlu0 %1417
        %v1419 = vsel %vm1055, %v1397, 0.0
        %1420 = vadd.xlane.f32.xlu0 %v1419
        %v1421 = vpop.xlane.xlu0 %1420
        %v1422 = vsel %vm1055, %v1398, 0.0
        %1423 = vadd.xlane.f32.xlu0 %v1422
        %v1424 = vpop.xlane.xlu0 %1423
        %v1425 = vsel %vm1055, %v1399, 0.0
        %1426 = vadd.xlane.f32.xlu0 %v1425
        %v1427 = vpop.xlane.xlu0 %1426
        %v1428 = vsel %vm1055, %v1400, 0.0
        %1429 = vadd.xlane.f32.xlu0 %v1428
        %v1430 = vpop.xlane.xlu0 %1429
        %v1431 = vsel %vm1055, %v1401, 0.0
        %1432 = vadd.xlane.f32.xlu0 %v1431
        %v1433 = vpop.xlane.xlu0 %1432
        %v1434 = vsel %vm1055, %v1402, 0.0
        %1435 = vadd.xlane.f32.xlu0 %v1434
        %v1436 = vpop.xlane.xlu0 %1435
        %v1437 = vsel %vm1055, %v1403, 0.0
        %1438 = vadd.xlane.f32.xlu0 %v1437
        %v1439 = vpop.xlane.xlu0 %1438
        %v1440 = vsel %vm1055, %v1404, 0.0
        %1441 = vadd.xlane.f32.xlu0 %v1440
        %v1442 = vpop.xlane.xlu0 %1441
        %v1443 = vsel %vm1055, %v1405, 0.0
        %1444 = vadd.xlane.f32.xlu0 %v1443
        %v1445 = vpop.xlane.xlu0 %1444
        %v1446 = vsel %vm1055, %v1406, 0.0
        %1447 = vadd.xlane.f32.xlu0 %v1446
        %v1448 = vpop.xlane.xlu0 %1447
        %v1449 = vsel %vm1055, %v1407, 0.0
        %1450 = vadd.xlane.f32.xlu0 %v1449
        %v1451 = vpop.xlane.xlu0 %1450
        %v1452 = vsel %vm1055, %v1408, 0.0
        %1453 = vadd.xlane.f32.xlu0 %v1452
        %v1454 = vpop.xlane.xlu0 %1453
        %v1455 = vsel %vm1055, %v1409, 0.0
        %1456 = vadd.xlane.f32.xlu0 %v1455
        %v1457 = vpop.xlane.xlu0 %1456
        %v1458 = vmul.f32 %v1249, %v1232
        %v1459 = vmul.f32 %v1251, %v1233
        %v1460 = vmul.f32 %v1253, %v1234
        %v1461 = vmul.f32 %v1255, %v1235
        %v1462 = vmul.f32 %v1257, %v1236
        %v1463 = vmul.f32 %v1259, %v1237
        %v1464 = vmul.f32 %v1261, %v1238
        %v1465 = vmul.f32 %v1263, %v1239
        %v1466 = vmul.f32 %v1265, %v1240
        %v1467 = vmul.f32 %v1267, %v1241
        %v1468 = vmul.f32 %v1269, %v1242
        %v1469 = vmul.f32 %v1271, %v1243
        %v1470 = vmul.f32 %v1273, %v1244
        %v1471 = vmul.f32 %v1275, %v1245
        %v1472 = vmul.f32 %v1277, %v1246
        %v1473 = vmul.f32 %v1279, %v1247
        %v1474 = vsel %vm1055, %v1458, 0.0
        %1475 = vadd.xlane.f32.xlu0 %v1474
        %v1476 = vpop.xlane.xlu0 %1475
        %v1477 = vsel %vm1055, %v1459, 0.0
        %1478 = vadd.xlane.f32.xlu0 %v1477
        %v1479 = vpop.xlane.xlu0 %1478
        %v1480 = vsel %vm1055, %v1460, 0.0
        %1481 = vadd.xlane.f32.xlu0 %v1480
        %v1482 = vpop.xlane.xlu0 %1481
        %v1483 = vsel %vm1055, %v1461, 0.0
        %1484 = vadd.xlane.f32.xlu0 %v1483
        %v1485 = vpop.xlane.xlu0 %1484
        %v1486 = vsel %vm1055, %v1462, 0.0
        %1487 = vadd.xlane.f32.xlu0 %v1486
        %v1488 = vpop.xlane.xlu0 %1487
        %v1489 = vsel %vm1055, %v1463, 0.0
        %1490 = vadd.xlane.f32.xlu0 %v1489
        %v1491 = vpop.xlane.xlu0 %1490
        %v1492 = vsel %vm1055, %v1464, 0.0
        %1493 = vadd.xlane.f32.xlu0 %v1492
        %v1494 = vpop.xlane.xlu0 %1493
        %v1495 = vsel %vm1055, %v1465, 0.0
        %1496 = vadd.xlane.f32.xlu0 %v1495
        %v1497 = vpop.xlane.xlu0 %1496
        %v1498 = vsel %vm1055, %v1466, 0.0
        %1499 = vadd.xlane.f32.xlu0 %v1498
        %v1500 = vpop.xlane.xlu0 %1499
        %v1501 = vsel %vm1055, %v1467, 0.0
        %1502 = vadd.xlane.f32.xlu0 %v1501
        %v1503 = vpop.xlane.xlu0 %1502
        %v1504 = vsel %vm1055, %v1468, 0.0
        %1505 = vadd.xlane.f32.xlu0 %v1504
        %v1506 = vpop.xlane.xlu0 %1505
        %v1507 = vsel %vm1055, %v1469, 0.0
        %1508 = vadd.xlane.f32.xlu0 %v1507
        %v1509 = vpop.xlane.xlu0 %1508
        %v1510 = vsel %vm1055, %v1470, 0.0
        %1511 = vadd.xlane.f32.xlu0 %v1510
        %v1512 = vpop.xlane.xlu0 %1511
        %v1513 = vsel %vm1055, %v1471, 0.0
        %1514 = vadd.xlane.f32.xlu0 %v1513
        %v1515 = vpop.xlane.xlu0 %1514
        %v1516 = vsel %vm1055, %v1472, 0.0
        %1517 = vadd.xlane.f32.xlu0 %v1516
        %v1518 = vpop.xlane.xlu0 %1517
        %v1519 = vsel %vm1055, %v1473, 0.0
        %1520 = vadd.xlane.f32.xlu0 %v1519
        %v1521 = vpop.xlane.xlu0 %1520
        %v1522 = vsub.f32 0.0, %v1476
        %v1523 = vsub.f32 0.0, %v1479
        %v1524 = vsub.f32 0.0, %v1482
        %v1525 = vsub.f32 0.0, %v1485
        %v1526 = vsub.f32 0.0, %v1488
        %v1527 = vsub.f32 0.0, %v1491
        %v1528 = vsub.f32 0.0, %v1494
        %v1529 = vsub.f32 0.0, %v1497
        %v1530 = vsub.f32 0.0, %v1500
        %v1531 = vsub.f32 0.0, %v1503
        %v1532 = vsub.f32 0.0, %v1506
        %v1533 = vsub.f32 0.0, %v1509
        %v1534 = vsub.f32 0.0, %v1512
        %v1535 = vsub.f32 0.0, %v1515
        %v1536 = vsub.f32 0.0, %v1518
        %v1537 = vsub.f32 0.0, %v1521
        %vm1538 = vcmp.eq.s32.totalorder %v1297, 0
        %v1539 = vsel %vm1538, %v1412, 0.0
        %v1540 = vsel %vm1538, %v1415, 0.0
        %v1541 = vsel %vm1538, %v1418, 0.0
        %v1542 = vsel %vm1538, %v1421, 0.0
        %v1543 = vsel %vm1538, %v1424, 0.0
        %v1544 = vsel %vm1538, %v1427, 0.0
        %v1545 = vsel %vm1538, %v1430, 0.0
        %v1546 = vsel %vm1538, %v1433, 0.0
        %v1547 = vsel %vm1538, %v1436, 0.0
        %v1548 = vsel %vm1538, %v1439, 0.0
        %v1549 = vsel %vm1538, %v1442, 0.0
        %v1550 = vsel %vm1538, %v1445, 0.0
        %v1551 = vsel %vm1538, %v1448, 0.0
        %v1552 = vsel %vm1538, %v1451, 0.0
        %v1553 = vsel %vm1538, %v1454, 0.0
        %v1554 = vsel %vm1538, %v1457, 0.0
        %vm1555 = vcmp.eq.s32.totalorder %v1297, 1
        %1557 = vset.pattern.permute.xlu0 0
        %1558 = vperm.xlu0 %1557, %v1016
        %v1559 = vpop.permute.xlu0 %1558
        %1562 = vset.pattern.permute.xlu0 0
        %1563 = vperm.xlu0 %1562, %v1018
        %v1564 = vpop.permute.xlu0 %1563
        %1567 = vset.pattern.permute.xlu0 0
        %1568 = vperm.xlu0 %1567, %v1021
        %v1569 = vpop.permute.xlu0 %1568
        %1572 = vset.pattern.permute.xlu0 0
        %1573 = vperm.xlu0 %1572, %v1023
        %v1574 = vpop.permute.xlu0 %1573
        %1577 = vset.pattern.permute.xlu0 0
        %1578 = vperm.xlu0 %1577, %v1026
        %v1579 = vpop.permute.xlu0 %1578
        %1582 = vset.pattern.permute.xlu0 0
        %1583 = vperm.xlu0 %1582, %v1028
        %v1584 = vpop.permute.xlu0 %1583
        %1587 = vset.pattern.permute.xlu0 0
        %1588 = vperm.xlu0 %1587, %v1031
        %v1589 = vpop.permute.xlu0 %1588
        %1592 = vset.pattern.permute.xlu0 0
        %1593 = vperm.xlu0 %1592, %v1033
        %v1594 = vpop.permute.xlu0 %1593
        %1597 = vset.pattern.permute.xlu0 0
        %1598 = vperm.xlu0 %1597, %v1036
        %v1599 = vpop.permute.xlu0 %1598
        %1602 = vset.pattern.permute.xlu0 0
        %1603 = vperm.xlu0 %1602, %v1038
        %v1604 = vpop.permute.xlu0 %1603
        %1607 = vset.pattern.permute.xlu0 0
        %1608 = vperm.xlu0 %1607, %v1041
        %v1609 = vpop.permute.xlu0 %1608
        %1612 = vset.pattern.permute.xlu0 0
        %1613 = vperm.xlu0 %1612, %v1043
        %v1614 = vpop.permute.xlu0 %1613
        %1617 = vset.pattern.permute.xlu0 0
        %1618 = vperm.xlu0 %1617, %v1046
        %v1619 = vpop.permute.xlu0 %1618
        %1622 = vset.pattern.permute.xlu0 0
        %1623 = vperm.xlu0 %1622, %v1048
        %v1624 = vpop.permute.xlu0 %1623
        %1627 = vset.pattern.permute.xlu0 0
        %1628 = vperm.xlu0 %1627, %v1051
        %v1629 = vpop.permute.xlu0 %1628
        %1632 = vset.pattern.permute.xlu0 0
        %1633 = vperm.xlu0 %1632, %v1053
        %v1634 = vpop.permute.xlu0 %1633
        %v1636 = vsel %vm1555, %v1559, 0.0
        %v1637 = vsel %vm1555, %v1564, 0.0
        %v1638 = vsel %vm1555, %v1569, 0.0
        %v1639 = vsel %vm1555, %v1574, 0.0
        %v1640 = vsel %vm1555, %v1579, 0.0
        %v1641 = vsel %vm1555, %v1584, 0.0
        %v1642 = vsel %vm1555, %v1589, 0.0
        %v1643 = vsel %vm1555, %v1594, 0.0
        %v1644 = vsel %vm1555, %v1599, 0.0
        %v1645 = vsel %vm1555, %v1604, 0.0
        %v1646 = vsel %vm1555, %v1609, 0.0
        %v1647 = vsel %vm1555, %v1614, 0.0
        %v1648 = vsel %vm1555, %v1619, 0.0
        %v1649 = vsel %vm1555, %v1624, 0.0
        %v1650 = vsel %vm1555, %v1629, 0.0
        %v1651 = vsel %vm1555, %v1634, 0.0
        %v1652 = vadd.f32 %v1539, %v1636
        %v1653 = vadd.f32 %v1540, %v1637
        %v1654 = vadd.f32 %v1541, %v1638
        %v1655 = vadd.f32 %v1542, %v1639
        %v1656 = vadd.f32 %v1543, %v1640
        %v1657 = vadd.f32 %v1544, %v1641
        %v1658 = vadd.f32 %v1545, %v1642
        %v1659 = vadd.f32 %v1546, %v1643
        %v1660 = vadd.f32 %v1547, %v1644
        %v1661 = vadd.f32 %v1548, %v1645
        %v1662 = vadd.f32 %v1549, %v1646
        %v1663 = vadd.f32 %v1550, %v1647
        %v1664 = vadd.f32 %v1551, %v1648
        %v1665 = vadd.f32 %v1552, %v1649
        %v1666 = vadd.f32 %v1553, %v1650
        %v1667 = vadd.f32 %v1554, %v1651
        %vm1668 = vcmp.eq.s32.totalorder %v1297, 2
        %v1669 = vsel %vm1668, %v1522, 0.0
        %v1670 = vsel %vm1668, %v1523, 0.0
        %v1671 = vsel %vm1668, %v1524, 0.0
        %v1672 = vsel %vm1668, %v1525, 0.0
        %v1673 = vsel %vm1668, %v1526, 0.0
        %v1674 = vsel %vm1668, %v1527, 0.0
        %v1675 = vsel %vm1668, %v1528, 0.0
        %v1676 = vsel %vm1668, %v1529, 0.0
        %v1677 = vsel %vm1668, %v1530, 0.0
        %v1678 = vsel %vm1668, %v1531, 0.0
        %v1679 = vsel %vm1668, %v1532, 0.0
        %v1680 = vsel %vm1668, %v1533, 0.0
        %v1681 = vsel %vm1668, %v1534, 0.0
        %v1682 = vsel %vm1668, %v1535, 0.0
        %v1683 = vsel %vm1668, %v1536, 0.0
        %v1684 = vsel %vm1668, %v1537, 0.0
        %v1685 = vadd.f32 %v1652, %v1669
        %v1686 = vadd.f32 %v1653, %v1670
        %v1687 = vadd.f32 %v1654, %v1671
        %v1688 = vadd.f32 %v1655, %v1672
        %v1689 = vadd.f32 %v1656, %v1673
        %v1690 = vadd.f32 %v1657, %v1674
        %v1691 = vadd.f32 %v1658, %v1675
        %v1692 = vadd.f32 %v1659, %v1676
        %v1693 = vadd.f32 %v1660, %v1677
        %v1694 = vadd.f32 %v1661, %v1678
        %v1695 = vadd.f32 %v1662, %v1679
        %v1696 = vadd.f32 %v1663, %v1680
        %v1697 = vadd.f32 %v1664, %v1681
        %v1698 = vadd.f32 %v1665, %v1682
        %v1699 = vadd.f32 %v1666, %v1683
        %v1700 = vadd.f32 %v1667, %v1684
        %1701 = vxpose.xlu0.b32.start [1/16] %v1685, 128
        %1702 = vxpose.xlu0.b32.cont [2/16] %v1686, 128
        %1703 = vxpose.xlu0.b32.cont [3/16] %v1687, 128
        %1704 = vxpose.xlu0.b32.cont [4/16] %v1688, 128
        %1705 = vxpose.xlu0.b32.cont [5/16] %v1689, 128
        %1706 = vxpose.xlu0.b32.cont [6/16] %v1690, 128
        %1707 = vxpose.xlu0.b32.cont [7/16] %v1691, 128
        %1708 = vxpose.xlu0.b32.cont [8/16] %v1692, 128
        %1709 = vxpose.xlu0.b32.cont [9/16] %v1693, 128
        %1710 = vxpose.xlu0.b32.cont [10/16] %v1694, 128
        %1711 = vxpose.xlu0.b32.cont [11/16] %v1695, 128
        %1712 = vxpose.xlu0.b32.cont [12/16] %v1696, 128
        %1713 = vxpose.xlu0.b32.cont [13/16] %v1697, 128
        %1714 = vxpose.xlu0.b32.cont [14/16] %v1698, 128
        %1715 = vxpose.xlu0.b32.cont [15/16] %v1699, 128
        %1716 = vxpose.xlu0.b32.end [16/16] %v1700, 128
        %v1717 = vpop.trf.xlu0
        %v1718 = vpop.trf.xlu0
        %v1719 = vpop.trf.xlu0
        %v1720 = vpop.trf.xlu0
        %v1721 = vpop.trf.xlu0
        %v1722 = vpop.trf.xlu0
        %v1723 = vpop.trf.xlu0
        %v1724 = vpop.trf.xlu0
        %v1725 = vpop.trf.xlu0
        %v1726 = vpop.trf.xlu0
        %v1727 = vpop.trf.xlu0
        %v1728 = vpop.trf.xlu0
        %v1729 = vpop.trf.xlu0
        %v1730 = vpop.trf.xlu0
        %v1731 = vpop.trf.xlu0
        %v1732 = vpop.trf.xlu0
        %1733 = vst [vmem:[%s425] sm:$0xff] %v1717
        %s1734 = sand.u32 %s298, 1
        %s1735 = scalar_lea.sflag [#allocation4], %s1734
        %s1736 = sand.u32 %s298, 1
        %s1737 = smul.addr %s1736, 8
        %s1738 = scalar_lea.vmem [#allocation3], %s1737
        // Predicated region
        $region69: #{tpu_custom_call.1} parent=67 // pred_check
          %p1739 = pneg %p308
        $region70: #{tpu_custom_call.1} parent=67 // pred_check_branch
          %1741 = sbr.rel (%p1739) target = $region72
        $region71: #{tpu_custom_call.1} parent=67 // pred_region
          %1743 = vsyncadd %s1735, 0
          %s1744 = smul.addr %s28, 8
          %s1745 = scalar_lea.hbm %s12, %s1744
          %s1747 = sshll.u32 %s1738, 4
          %s1748 = int_to_ptr.vmem [resolvable:$true] %s1747
          %s1749 = sshll.u32 %s1745, 4
          %s1750 = int_to_ptr.hbm [resolvable:$true] %s1749
          %1752 = dma.vmem_to_hbm [thread:$0]  %s1748, 128, %s1750, %s1735
        $region72: #{tpu_custom_call.1} parent=67 // pred_fallthru
          _
      $region68: #{tpu_custom_call.1} parent=5 // pred_fallthru
        _
      %p1753 = scmp.le.s32.totalorder 2, %s23
      // Predicated region
      $region73: #{tpu_custom_call.1} parent=5 // pred_check
        %p1754 = pneg %p1753
      $region74: #{tpu_custom_call.1} parent=5 // pred_check_branch
        %1756 = sbr.rel (%p1754) target = $region76
      $region75: #{tpu_custom_call.1} parent=5 // pred_region
        %s1757 = ssub.s32 %s23, 2
        // Predicated region
        $region77: #{tpu_custom_call.1} parent=75 // pred_check
          %p1758 = pneg %p314
        $region78: #{tpu_custom_call.1} parent=75 // pred_check_branch
          %1760 = sbr.rel (%p1758) target = $region80
        $region79: #{tpu_custom_call.1} parent=75 // pred_region
          %s1761 = sand.u32 %s299, 1
          %s1762 = scalar_lea.sflag [#allocation4], %s1761
          %s1763 = sand.u32 %s299, 1
          %s1764 = smul.addr %s1763, 8
          %s1765 = scalar_lea.vmem [#allocation3], %s1764
          %1767 = dma.done %s1762, 128
        $region80: #{tpu_custom_call.1} parent=75 // pred_fallthru
          _
      $region76: #{tpu_custom_call.1} parent=5 // pred_fallthru
        _
    $region6: #{tpu_custom_call.1} parent=1 // loop_footer
      %s27 = sadd.s32 1, %s23
    $region7: #{tpu_custom_call.1} parent=1 // loop_footer_branch
      %22 = sbr.rel target = $region3
    $region8: #{tpu_custom_call.1} parent=1 // loop_exit
      _
    %1768 = vsyncpa [#allocation4], 1
    %s1769 = scalar_lea.sflag [#allocation4], 1
    %1770 = vsyncpa %s1769, 1

</llo_original>
